<compile_context>
chip_gen: v6e
topology: v6e:2x2x1
jax: 0.10.0
libtpu: 0.0.40
codegen_flags: <defaults>
</compile_context>

<pallas_src>
import jax
import jax.numpy as jnp
import numpy as np
from jax.experimental import pallas as pl
from jax.experimental.pallas import tpu as pltpu

GATE = 128  # lane-aligned gate width (one 128-lane segment per gate)


# ----------------------------- Pallas kernel --------------------------------
def bigru_kernel(x_ref, w_ref, b_ref, out_ref):
    G = GATE
    T, D = x_ref.shape
    O = out_ref.shape[1]

    x = x_ref[...]                                       # (T, D)      bf16

    # Packed weight blob (bf16):
    #   rows 0:D        cols 0:6G        -> input proj, [fwd gates | bwd gates]
    #   rows D:D+G      cols 0:3G        -> W_hh (forward), zero rows >= H
    #   rows D:D+G      cols 3G:3G+O     -> fc weight, forward half  (zero rows >= H)
    #   rows D:D+G      cols 4G:4G+O     -> fc weight, backward half (zero rows >= H)
    w_ih = w_ref[0:D, :]                                 # (D, 6G)     bf16
    w_hh_f = w_ref[D:D + G, 0:3 * G]                     # (G, 3G)     bf16
    fc_w_f = w_ref[D:D + G, 3 * G:3 * G + O]             # (G, O)      bf16
    fc_w_b = w_ref[D:D + G, 4 * G:4 * G + O]             # (G, O)      bf16

    # Packed bias blob (f32):
    #   row 0: input-projection bias (r/z hidden biases already folded in)
    #   row 1: forward n-gate hidden bias;  row 2: backward n-gate hidden bias
    #   row 3: fc bias
    b_x = b_ref[0:1, :]                                  # (1, 6G)     f32
    b_hn_f = b_ref[1:2, 0:G]                             # (1, G)      f32
    b_hn_b = b_ref[2:3, 0:G]                             # (1, G)      f32
    fc_b = b_ref[3:4, 0:O]                               # (1, O)      f32

    # One fused input projection for both directions, all T rows at once.
    # (T, 6G) = (8, 768) f32 stays register-resident.
    gx = jnp.dot(x, w_ih, preferred_element_type=jnp.float32) + b_x   # (T, 6G)

    # ---- backward direction: out[:, -1, H:] is one reverse-GRU step on
    # x[T-1] starting from zeros.  gh == 0, so no recurrent matmul at all.
    gb = gx[T - 1:T, 3 * G:6 * G]                        # (1, 3G)
    rb = jax.nn.sigmoid(gb[:, 0:G])
    zb = jax.nn.sigmoid(gb[:, G:2 * G])
    nb = jnp.tanh(gb[:, 2 * G:3 * G] + rb * b_hn_b)
    h_bwd = (1.0 - zb) * nb                              # (1, G); z*h_prev == 0

    # Backward half of the FC head + bias: independent of the forward chain,
    # its MXU/VPU work hides under the recurrence latency.
    partial = (jnp.dot(h_bwd.astype(jnp.bfloat16), fc_w_b,
                       preferred_element_type=jnp.float32) + fc_b)    # (1, O)

    # ---- forward recurrence, fully unrolled.  t = 0 specialized (h0 == 0):
    # no h@W_hh matmul / bf16 cast at the head of the serial chain.
    g0 = gx[0:1, 0:3 * G]
    r0 = jax.nn.sigmoid(g0[:, 0:G])
    z0 = jax.nn.sigmoid(g0[:, G:2 * G])
    n0 = jnp.tanh(g0[:, 2 * G:3 * G] + r0 * b_hn_f)
    h = (1.0 - z0) * n0                                  # (1, G)

    for t in range(1, T):
        # MXU in bf16, accumulate + all elementwise math in f32.
        gh = jnp.dot(h.astype(jnp.bfloat16), w_hh_f,
                     preferred_element_type=jnp.float32)              # (1, 3G)
        gt = gx[t:t + 1, 0:3 * G]
        # Gate slices are 128-lane-aligned vreg selects (no XLU rotates).
        r = jax.nn.sigmoid(gt[:, 0:G] + gh[:, 0:G])
        z = jax.nn.sigmoid(gt[:, G:2 * G] + gh[:, G:2 * G])
        n = jnp.tanh(gt[:, 2 * G:3 * G] + r * (gh[:, 2 * G:3 * G] + b_hn_f))
        h = (1.0 - z) * n + z * h                        # (1, G)

    out_ref[...] = (jnp.dot(h.astype(jnp.bfloat16), fc_w_f,
                            preferred_element_type=jnp.float32) + partial)


# ------------------------------- wrapper -------------------------------------
def bigru_forward(x, params):
    """x: (1, T, D) f32; params use PyTorch layouts (see bigru_reference)."""
    G = GATE
    B, T, D = x.shape
    assert B == 1, "module's forward hardcodes h0 batch size = 1"
    H = params["w_hh_f"].shape[1]
    O = params["fc_w"].shape[0]
    assert H <= G, "lane-aligned gate packing assumes hidden_size <= 128"

    def expand_gate_cols(m):
        # (K, 3H) -> (K, 3G): each gate gets its own 128-lane segment, zero pad.
        K = m.shape[0]
        out = jnp.zeros((K, 3 * G), jnp.float32)
        for g in range(3):
            out = out.at[:, g * G:g * G + H].set(m[:, g * H:(g + 1) * H])
        return out

    def dir_bias(b_ih, b_hh):
        b_ih = jnp.reshape(b_ih, (1, 3 * H)).astype(jnp.float32)
        b_hh = jnp.reshape(b_hh, (1, 3 * H)).astype(jnp.float32)
        # Fold r/z hidden biases into the one-shot input-projection bias; the
        # n-gate hidden bias must stay separate (it sits inside the r* term).
        b_x = b_ih + jnp.concatenate(
            [b_hh[:, :2 * H], jnp.zeros((1, H), jnp.float32)], axis=1)
        return expand_gate_cols(b_x), b_hh[:, 2 * H:]    # (1, 3G), (1, H)

    b_xf, b_hn_f = dir_bias(params["b_ih_f"], params["b_hh_f"])
    b_xb, b_hn_b = dir_bias(params["b_ih_b"], params["b_hh_b"])

    f32 = jnp.float32
    # ---- packed bf16 weight blob --------------------------------------------
    wblob = jnp.zeros((D + G, 6 * G), f32)
    wblob = wblob.at[0:D, 0:3 * G].set(
        expand_gate_cols(params["w_ih_f"].T.astype(f32)))             # (D, 3G)
    wblob = wblob.at[0:D, 3 * G:6 * G].set(
        expand_gate_cols(params["w_ih_b"].T.astype(f32)))             # (D, 3G)
    wblob = wblob.at[D:D + H, 0:3 * G].set(
        expand_gate_cols(params["w_hh_f"].T.astype(f32)))             # (H, 3G)
    fc_w = params["fc_w"].astype(f32)                                 # (O, 2H)
    wblob = wblob.at[D:D + H, 3 * G:3 * G + O].set(fc_w[:, 0:H].T)    # (H, O)
    wblob = wblob.at[D:D + H, 4 * G:4 * G + O].set(fc_w[:, H:2 * H].T)
    wblob = wblob.astype(jnp.bfloat16)

    # ---- packed f32 bias blob -----------------------------------------------
    bblob = jnp.zeros((8, 6 * G), f32)
    bblob = bblob.at[0, 0:3 * G].set(b_xf[0])
    bblob = bblob.at[0, 3 * G:6 * G].set(b_xb[0])
    bblob = bblob.at[1, 0:H].set(b_hn_f[0])
    bblob = bblob.at[2, 0:H].set(b_hn_b[0])
    bblob = bblob.at[3, 0:O].set(jnp.reshape(params["fc_b"], (O,)).astype(f32))

    vmem = pl.BlockSpec(memory_space=pltpu.MemorySpace.VMEM)
    out = pl.pallas_call(
        bigru_kernel,
        out_shape=jax.ShapeDtypeStruct((1, O), jnp.float32),
        in_specs=[vmem, vmem, vmem],
        out_specs=vmem,
    )(x[0].astype(jnp.bfloat16), wblob, bblob)
    return out


# ------------------------- pure-JAX reference (PyTorch semantics) ------------
def _gru_cell_ref(x_t, h, w_ih, w_hh, b_ih, b_hh, H):
    gx = x_t @ w_ih.T + b_ih
    gh = h @ w_hh.T + b_hh
    r = jax.nn.sigmoid(gx[:, :H] + gh[:, :H])
    z = jax.nn.sigmoid(gx[:, H:2 * H] + gh[:, H:2 * H])
    n = jnp.tanh(gx[:, 2 * H:] + r * gh[:, 2 * H:])
    return (1.0 - z) * n + z * h


def bigru_reference(x, params):
    B, T, D = x.shape
    H = params["w_hh_f"].shape[1]
    xs = x[0]                                                       # (T, D)

    # forward direction
    h = jnp.zeros((1, H), jnp.float32)
    fwd_outs = []
    for t in range(T):
        h = _gru_cell_ref(xs[t:t + 1], h, params["w_ih_f"], params["w_hh_f"],
                          params["b_ih_f"], params["b_hh_f"], H)
        fwd_outs.append(h)
    # backward direction (processes reversed sequence; output re-reversed)
    h = jnp.zeros((1, H), jnp.float32)
    bwd_outs = [None] * T
    for t in reversed(range(T)):
        h = _gru_cell_ref(xs[t:t + 1], h, params["w_ih_b"], params["w_hh_b"],
                          params["b_ih_b"], params["b_hh_b"], H)
        bwd_outs[t] = h
    out_last = jnp.concatenate([fwd_outs[-1], bwd_outs[-1]], axis=1)  # (1, 2H)
    return out_last @ params["fc_w"].T + params["fc_b"]


# --------------------------------- main --------------------------------------
if __name__ == "__main__":
    # Small, module-consistent shapes: batch=1 (forced by h0), seq=8,
    # input_size=16, hidden_size=32, output_size=8.
    B, T, D, H, O = 1, 8, 16, 32, 8

    key = jax.random.PRNGKey(0)
    keys = jax.random.split(key, 12)
    bound = 1.0 / np.sqrt(H)

    def u(k, shape):
        return jax.random.uniform(k, shape, jnp.float32, -bound, bound)

    params = {
        # forward direction (PyTorch layouts, gate order [r, z, n])
        "w_ih_f": u(keys[0], (3 * H, D)),
        "w_hh_f": u(keys[1], (3 * H, H)),
        "b_ih_f": u(keys[2], (1, 3 * H)),
        "b_hh_f": u(keys[3], (1, 3 * H)),
        # backward direction
        "w_ih_b": u(keys[4], (3 * H, D)),
        "w_hh_b": u(keys[5], (3 * H, H)),
        "b_ih_b": u(keys[6], (1, 3 * H)),
        "b_hh_b": u(keys[7], (1, 3 * H)),
        # fc head
        "fc_w": u(keys[8], (O, 2 * H)),
        "fc_b": u(keys[9], (1, O)),
    }

    x = jax.random.normal(keys[10], (B, T, D), jnp.float32)

    out = bigru_forward(x, params)
    out = jax.block_until_ready(out)

    ref = bigru_reference(x, params)
    # Kernel feeds the MXU bf16 operands (f32 accumulation); the f32 reference
    # therefore needs a looser tolerance.
    np.testing.assert_allclose(np.asarray(out), np.asarray(ref),
                               rtol=5e-2, atol=5e-2)
    print("KERNEL_OK")
</pallas_src>

<mosaic_0001>
module attributes {stable_mosaic.version = 11 : i64} {
  func.func @bigru_kernel(%arg0: memref<8x16xbf16, #tpu.memory_space<vmem>>, %arg1: memref<144x768xbf16, #tpu.memory_space<vmem>>, %arg2: memref<8x768xf32, #tpu.memory_space<vmem>>, %arg3: memref<1x8xf32, #tpu.memory_space<vmem>>) attributes {dimension_semantics = [], scalar_prefetch = 0 : i64, scratch_operands = 0 : i64, tpu.core_type = #tpu.core_type<tc>} {
    %c0 = arith.constant 0 : index
    %c0_0 = arith.constant 0 : index
    %0 = vector.load %arg0[%c0, %c0_0] : memref<8x16xbf16, #tpu.memory_space<vmem>>, vector<8x16xbf16>
    %c0_1 = arith.constant 0 : index
    %c0_2 = arith.constant 0 : index
    %1 = vector.load %arg1[%c0_1, %c0_2] : memref<144x768xbf16, #tpu.memory_space<vmem>>, vector<16x768xbf16>
    %c16 = arith.constant 16 : index
    %c0_3 = arith.constant 0 : index
    %2 = vector.load %arg1[%c16, %c0_3] : memref<144x768xbf16, #tpu.memory_space<vmem>>, vector<128x384xbf16>
    %c16_4 = arith.constant 16 : index
    %c384 = arith.constant 384 : index
    %3 = vector.load %arg1[%c16_4, %c384] : memref<144x768xbf16, #tpu.memory_space<vmem>>, vector<128x8xbf16>
    %c16_5 = arith.constant 16 : index
    %c512 = arith.constant 512 : index
    %4 = vector.load %arg1[%c16_5, %c512] : memref<144x768xbf16, #tpu.memory_space<vmem>>, vector<128x8xbf16>
    %c0_6 = arith.constant 0 : index
    %c0_7 = arith.constant 0 : index
    %5 = vector.load %arg2[%c0_6, %c0_7] : memref<8x768xf32, #tpu.memory_space<vmem>>, vector<1x768xf32>
    %c1 = arith.constant 1 : index
    %c0_8 = arith.constant 0 : index
    %6 = vector.load %arg2[%c1, %c0_8] : memref<8x768xf32, #tpu.memory_space<vmem>>, vector<1x128xf32>
    %c2 = arith.constant 2 : index
    %c0_9 = arith.constant 0 : index
    %7 = vector.load %arg2[%c2, %c0_9] : memref<8x768xf32, #tpu.memory_space<vmem>>, vector<1x128xf32>
    %c3 = arith.constant 3 : index
    %c0_10 = arith.constant 0 : index
    %8 = vector.load %arg2[%c3, %c0_10] : memref<8x768xf32, #tpu.memory_space<vmem>>, vector<1x8xf32>
    %cst = arith.constant dense<0.000000e+00> : vector<8x768xf32>
    %9 = tpu.matmul %0, %1, %cst {dimension_numbers = #tpu.dot_dimension_numbers<[1], [0], [0], [1], [0, 0, 1, 1], [], []>} : vector<8x16xbf16>, vector<16x768xbf16>, vector<8x768xf32> -> vector<8x768xf32>
    %10 = vector.broadcast %5 : vector<1x768xf32> to vector<8x768xf32>
    %11 = arith.addf %9, %10 : vector<8x768xf32>
    %12 = vector.extract_strided_slice %11 {offsets = [7, 384], sizes = [1, 384], strides = [1, 1]} : vector<8x768xf32> to vector<1x384xf32>
    %13 = vector.extract_strided_slice %12 {offsets = [0, 0], sizes = [1, 128], strides = [1, 1]} : vector<1x384xf32> to vector<1x128xf32>
    %14 = arith.negf %13 : vector<1x128xf32>
    %15 = math.exp %14 : vector<1x128xf32>
    %cst_11 = arith.constant 1.000000e+00 : f32
    %16 = vector.broadcast %cst_11 : f32 to vector<1x128xf32>
    %17 = arith.addf %16, %15 : vector<1x128xf32>
    %18 = arith.divf %16, %17 : vector<1x128xf32>
    %19 = vector.extract_strided_slice %12 {offsets = [0, 128], sizes = [1, 128], strides = [1, 1]} : vector<1x384xf32> to vector<1x128xf32>
    %20 = arith.negf %19 : vector<1x128xf32>
    %21 = math.exp %20 : vector<1x128xf32>
    %cst_12 = arith.constant 1.000000e+00 : f32
    %22 = vector.broadcast %cst_12 : f32 to vector<1x128xf32>
    %23 = arith.addf %22, %21 : vector<1x128xf32>
    %24 = arith.divf %22, %23 : vector<1x128xf32>
    %25 = vector.extract_strided_slice %12 {offsets = [0, 256], sizes = [1, 128], strides = [1, 1]} : vector<1x384xf32> to vector<1x128xf32>
    %26 = arith.mulf %18, %7 : vector<1x128xf32>
    %27 = arith.addf %25, %26 : vector<1x128xf32>
    %28 = math.tanh %27 : vector<1x128xf32>
    %cst_13 = arith.constant 1.000000e+00 : f32
    %29 = vector.broadcast %cst_13 : f32 to vector<1x128xf32>
    %30 = arith.subf %29, %24 : vector<1x128xf32>
    %31 = arith.mulf %30, %28 : vector<1x128xf32>
    %32 = arith.truncf %31 : vector<1x128xf32> to vector<1x128xbf16>
    %cst_14 = arith.constant dense<0.000000e+00> : vector<1x8xf32>
    %33 = tpu.matmul %32, %4, %cst_14 {dimension_numbers = #tpu.dot_dimension_numbers<[1], [0], [0], [1], [0, 0, 1, 1], [], []>} : vector<1x128xbf16>, vector<128x8xbf16>, vector<1x8xf32> -> vector<1x8xf32>
    %34 = arith.addf %33, %8 : vector<1x8xf32>
    %35 = vector.extract_strided_slice %11 {offsets = [0, 0], sizes = [1, 384], strides = [1, 1]} : vector<8x768xf32> to vector<1x384xf32>
    %36 = vector.extract_strided_slice %35 {offsets = [0, 0], sizes = [1, 128], strides = [1, 1]} : vector<1x384xf32> to vector<1x128xf32>
    %37 = arith.negf %36 : vector<1x128xf32>
    %38 = math.exp %37 : vector<1x128xf32>
    %cst_15 = arith.constant 1.000000e+00 : f32
    %39 = vector.broadcast %cst_15 : f32 to vector<1x128xf32>
    %40 = arith.addf %39, %38 : vector<1x128xf32>
    %41 = arith.divf %39, %40 : vector<1x128xf32>
    %42 = vector.extract_strided_slice %35 {offsets = [0, 128], sizes = [1, 128], strides = [1, 1]} : vector<1x384xf32> to vector<1x128xf32>
    %43 = arith.negf %42 : vector<1x128xf32>
    %44 = math.exp %43 : vector<1x128xf32>
    %cst_16 = arith.constant 1.000000e+00 : f32
    %45 = vector.broadcast %cst_16 : f32 to vector<1x128xf32>
    %46 = arith.addf %45, %44 : vector<1x128xf32>
    %47 = arith.divf %45, %46 : vector<1x128xf32>
    %48 = vector.extract_strided_slice %35 {offsets = [0, 256], sizes = [1, 128], strides = [1, 1]} : vector<1x384xf32> to vector<1x128xf32>
    %49 = arith.mulf %41, %6 : vector<1x128xf32>
    %50 = arith.addf %48, %49 : vector<1x128xf32>
    %51 = math.tanh %50 : vector<1x128xf32>
    %cst_17 = arith.constant 1.000000e+00 : f32
    %52 = vector.broadcast %cst_17 : f32 to vector<1x128xf32>
    %53 = arith.subf %52, %47 : vector<1x128xf32>
    %54 = arith.mulf %53, %51 : vector<1x128xf32>
    %55 = arith.truncf %54 : vector<1x128xf32> to vector<1x128xbf16>
    %cst_18 = arith.constant dense<0.000000e+00> : vector<1x384xf32>
    %56 = tpu.matmul %55, %2, %cst_18 {dimension_numbers = #tpu.dot_dimension_numbers<[1], [0], [0], [1], [0, 0, 1, 1], [], []>} : vector<1x128xbf16>, vector<128x384xbf16>, vector<1x384xf32> -> vector<1x384xf32>
    %57 = vector.extract_strided_slice %11 {offsets = [1, 0], sizes = [1, 384], strides = [1, 1]} : vector<8x768xf32> to vector<1x384xf32>
    %58 = vector.extract_strided_slice %57 {offsets = [0, 0], sizes = [1, 128], strides = [1, 1]} : vector<1x384xf32> to vector<1x128xf32>
    %59 = vector.extract_strided_slice %56 {offsets = [0, 0], sizes = [1, 128], strides = [1, 1]} : vector<1x384xf32> to vector<1x128xf32>
    %60 = arith.addf %58, %59 : vector<1x128xf32>
    %61 = arith.negf %60 : vector<1x128xf32>
    %62 = math.exp %61 : vector<1x128xf32>
    %cst_19 = arith.constant 1.000000e+00 : f32
    %63 = vector.broadcast %cst_19 : f32 to vector<1x128xf32>
    %64 = arith.addf %63, %62 : vector<1x128xf32>
    %65 = arith.divf %63, %64 : vector<1x128xf32>
    %66 = vector.extract_strided_slice %57 {offsets = [0, 128], sizes = [1, 128], strides = [1, 1]} : vector<1x384xf32> to vector<1x128xf32>
    %67 = vector.extract_strided_slice %56 {offsets = [0, 128], sizes = [1, 128], strides = [1, 1]} : vector<1x384xf32> to vector<1x128xf32>
    %68 = arith.addf %66, %67 : vector<1x128xf32>
    %69 = arith.negf %68 : vector<1x128xf32>
    %70 = math.exp %69 : vector<1x128xf32>
    %cst_20 = arith.constant 1.000000e+00 : f32
    %71 = vector.broadcast %cst_20 : f32 to vector<1x128xf32>
    %72 = arith.addf %71, %70 : vector<1x128xf32>
    %73 = arith.divf %71, %72 : vector<1x128xf32>
    %74 = vector.extract_strided_slice %57 {offsets = [0, 256], sizes = [1, 128], strides = [1, 1]} : vector<1x384xf32> to vector<1x128xf32>
    %75 = vector.extract_strided_slice %56 {offsets = [0, 256], sizes = [1, 128], strides = [1, 1]} : vector<1x384xf32> to vector<1x128xf32>
    %76 = arith.addf %75, %6 : vector<1x128xf32>
    %77 = arith.mulf %65, %76 : vector<1x128xf32>
    %78 = arith.addf %74, %77 : vector<1x128xf32>
    %79 = math.tanh %78 : vector<1x128xf32>
    %cst_21 = arith.constant 1.000000e+00 : f32
    %80 = vector.broadcast %cst_21 : f32 to vector<1x128xf32>
    %81 = arith.subf %80, %73 : vector<1x128xf32>
    %82 = arith.mulf %81, %79 : vector<1x128xf32>
    %83 = arith.mulf %73, %54 : vector<1x128xf32>
    %84 = arith.addf %82, %83 : vector<1x128xf32>
    %85 = arith.truncf %84 : vector<1x128xf32> to vector<1x128xbf16>
    %cst_22 = arith.constant dense<0.000000e+00> : vector<1x384xf32>
    %86 = tpu.matmul %85, %2, %cst_22 {dimension_numbers = #tpu.dot_dimension_numbers<[1], [0], [0], [1], [0, 0, 1, 1], [], []>} : vector<1x128xbf16>, vector<128x384xbf16>, vector<1x384xf32> -> vector<1x384xf32>
    %87 = vector.extract_strided_slice %11 {offsets = [2, 0], sizes = [1, 384], strides = [1, 1]} : vector<8x768xf32> to vector<1x384xf32>
    %88 = vector.extract_strided_slice %87 {offsets = [0, 0], sizes = [1, 128], strides = [1, 1]} : vector<1x384xf32> to vector<1x128xf32>
    %89 = vector.extract_strided_slice %86 {offsets = [0, 0], sizes = [1, 128], strides = [1, 1]} : vector<1x384xf32> to vector<1x128xf32>
    %90 = arith.addf %88, %89 : vector<1x128xf32>
    %91 = arith.negf %90 : vector<1x128xf32>
    %92 = math.exp %91 : vector<1x128xf32>
    %cst_23 = arith.constant 1.000000e+00 : f32
    %93 = vector.broadcast %cst_23 : f32 to vector<1x128xf32>
    %94 = arith.addf %93, %92 : vector<1x128xf32>
    %95 = arith.divf %93, %94 : vector<1x128xf32>
    %96 = vector.extract_strided_slice %87 {offsets = [0, 128], sizes = [1, 128], strides = [1, 1]} : vector<1x384xf32> to vector<1x128xf32>
    %97 = vector.extract_strided_slice %86 {offsets = [0, 128], sizes = [1, 128], strides = [1, 1]} : vector<1x384xf32> to vector<1x128xf32>
    %98 = arith.addf %96, %97 : vector<1x128xf32>
    %99 = arith.negf %98 : vector<1x128xf32>
    %100 = math.exp %99 : vector<1x128xf32>
    %cst_24 = arith.constant 1.000000e+00 : f32
    %101 = vector.broadcast %cst_24 : f32 to vector<1x128xf32>
    %102 = arith.addf %101, %100 : vector<1x128xf32>
    %103 = arith.divf %101, %102 : vector<1x128xf32>
    %104 = vector.extract_strided_slice %87 {offsets = [0, 256], sizes = [1, 128], strides = [1, 1]} : vector<1x384xf32> to vector<1x128xf32>
    %105 = vector.extract_strided_slice %86 {offsets = [0, 256], sizes = [1, 128], strides = [1, 1]} : vector<1x384xf32> to vector<1x128xf32>
    %106 = arith.addf %105, %6 : vector<1x128xf32>
    %107 = arith.mulf %95, %106 : vector<1x128xf32>
    %108 = arith.addf %104, %107 : vector<1x128xf32>
    %109 = math.tanh %108 : vector<1x128xf32>
    %cst_25 = arith.constant 1.000000e+00 : f32
    %110 = vector.broadcast %cst_25 : f32 to vector<1x128xf32>
    %111 = arith.subf %110, %103 : vector<1x128xf32>
    %112 = arith.mulf %111, %109 : vector<1x128xf32>
    %113 = arith.mulf %103, %84 : vector<1x128xf32>
    %114 = arith.addf %112, %113 : vector<1x128xf32>
    %115 = arith.truncf %114 : vector<1x128xf32> to vector<1x128xbf16>
    %cst_26 = arith.constant dense<0.000000e+00> : vector<1x384xf32>
    %116 = tpu.matmul %115, %2, %cst_26 {dimension_numbers = #tpu.dot_dimension_numbers<[1], [0], [0], [1], [0, 0, 1, 1], [], []>} : vector<1x128xbf16>, vector<128x384xbf16>, vector<1x384xf32> -> vector<1x384xf32>
    %117 = vector.extract_strided_slice %11 {offsets = [3, 0], sizes = [1, 384], strides = [1, 1]} : vector<8x768xf32> to vector<1x384xf32>
    %118 = vector.extract_strided_slice %117 {offsets = [0, 0], sizes = [1, 128], strides = [1, 1]} : vector<1x384xf32> to vector<1x128xf32>
    %119 = vector.extract_strided_slice %116 {offsets = [0, 0], sizes = [1, 128], strides = [1, 1]} : vector<1x384xf32> to vector<1x128xf32>
    %120 = arith.addf %118, %119 : vector<1x128xf32>
    %121 = arith.negf %120 : vector<1x128xf32>
    %122 = math.exp %121 : vector<1x128xf32>
    %cst_27 = arith.constant 1.000000e+00 : f32
    %123 = vector.broadcast %cst_27 : f32 to vector<1x128xf32>
    %124 = arith.addf %123, %122 : vector<1x128xf32>
    %125 = arith.divf %123, %124 : vector<1x128xf32>
    %126 = vector.extract_strided_slice %117 {offsets = [0, 128], sizes = [1, 128], strides = [1, 1]} : vector<1x384xf32> to vector<1x128xf32>
    %127 = vector.extract_strided_slice %116 {offsets = [0, 128], sizes = [1, 128], strides = [1, 1]} : vector<1x384xf32> to vector<1x128xf32>
    %128 = arith.addf %126, %127 : vector<1x128xf32>
    %129 = arith.negf %128 : vector<1x128xf32>
    %130 = math.exp %129 : vector<1x128xf32>
    %cst_28 = arith.constant 1.000000e+00 : f32
    %131 = vector.broadcast %cst_28 : f32 to vector<1x128xf32>
    %132 = arith.addf %131, %130 : vector<1x128xf32>
    %133 = arith.divf %131, %132 : vector<1x128xf32>
    %134 = vector.extract_strided_slice %117 {offsets = [0, 256], sizes = [1, 128], strides = [1, 1]} : vector<1x384xf32> to vector<1x128xf32>
    %135 = vector.extract_strided_slice %116 {offsets = [0, 256], sizes = [1, 128], strides = [1, 1]} : vector<1x384xf32> to vector<1x128xf32>
    %136 = arith.addf %135, %6 : vector<1x128xf32>
    %137 = arith.mulf %125, %136 : vector<1x128xf32>
    %138 = arith.addf %134, %137 : vector<1x128xf32>
    %139 = math.tanh %138 : vector<1x128xf32>
    %cst_29 = arith.constant 1.000000e+00 : f32
    %140 = vector.broadcast %cst_29 : f32 to vector<1x128xf32>
    %141 = arith.subf %140, %133 : vector<1x128xf32>
    %142 = arith.mulf %141, %139 : vector<1x128xf32>
    %143 = arith.mulf %133, %114 : vector<1x128xf32>
    %144 = arith.addf %142, %143 : vector<1x128xf32>
    %145 = arith.truncf %144 : vector<1x128xf32> to vector<1x128xbf16>
    %cst_30 = arith.constant dense<0.000000e+00> : vector<1x384xf32>
    %146 = tpu.matmul %145, %2, %cst_30 {dimension_numbers = #tpu.dot_dimension_numbers<[1], [0], [0], [1], [0, 0, 1, 1], [], []>} : vector<1x128xbf16>, vector<128x384xbf16>, vector<1x384xf32> -> vector<1x384xf32>
    %147 = vector.extract_strided_slice %11 {offsets = [4, 0], sizes = [1, 384], strides = [1, 1]} : vector<8x768xf32> to vector<1x384xf32>
    %148 = vector.extract_strided_slice %147 {offsets = [0, 0], sizes = [1, 128], strides = [1, 1]} : vector<1x384xf32> to vector<1x128xf32>
    %149 = vector.extract_strided_slice %146 {offsets = [0, 0], sizes = [1, 128], strides = [1, 1]} : vector<1x384xf32> to vector<1x128xf32>
    %150 = arith.addf %148, %149 : vector<1x128xf32>
    %151 = arith.negf %150 : vector<1x128xf32>
    %152 = math.exp %151 : vector<1x128xf32>
    %cst_31 = arith.constant 1.000000e+00 : f32
    %153 = vector.broadcast %cst_31 : f32 to vector<1x128xf32>
    %154 = arith.addf %153, %152 : vector<1x128xf32>
    %155 = arith.divf %153, %154 : vector<1x128xf32>
    %156 = vector.extract_strided_slice %147 {offsets = [0, 128], sizes = [1, 128], strides = [1, 1]} : vector<1x384xf32> to vector<1x128xf32>
    %157 = vector.extract_strided_slice %146 {offsets = [0, 128], sizes = [1, 128], strides = [1, 1]} : vector<1x384xf32> to vector<1x128xf32>
    %158 = arith.addf %156, %157 : vector<1x128xf32>
    %159 = arith.negf %158 : vector<1x128xf32>
    %160 = math.exp %159 : vector<1x128xf32>
    %cst_32 = arith.constant 1.000000e+00 : f32
    %161 = vector.broadcast %cst_32 : f32 to vector<1x128xf32>
    %162 = arith.addf %161, %160 : vector<1x128xf32>
    %163 = arith.divf %161, %162 : vector<1x128xf32>
    %164 = vector.extract_strided_slice %147 {offsets = [0, 256], sizes = [1, 128], strides = [1, 1]} : vector<1x384xf32> to vector<1x128xf32>
    %165 = vector.extract_strided_slice %146 {offsets = [0, 256], sizes = [1, 128], strides = [1, 1]} : vector<1x384xf32> to vector<1x128xf32>
    %166 = arith.addf %165, %6 : vector<1x128xf32>
    %167 = arith.mulf %155, %166 : vector<1x128xf32>
    %168 = arith.addf %164, %167 : vector<1x128xf32>
    %169 = math.tanh %168 : vector<1x128xf32>
    %cst_33 = arith.constant 1.000000e+00 : f32
    %170 = vector.broadcast %cst_33 : f32 to vector<1x128xf32>
    %171 = arith.subf %170, %163 : vector<1x128xf32>
    %172 = arith.mulf %171, %169 : vector<1x128xf32>
    %173 = arith.mulf %163, %144 : vector<1x128xf32>
    %174 = arith.addf %172, %173 : vector<1x128xf32>
    %175 = arith.truncf %174 : vector<1x128xf32> to vector<1x128xbf16>
    %cst_34 = arith.constant dense<0.000000e+00> : vector<1x384xf32>
    %176 = tpu.matmul %175, %2, %cst_34 {dimension_numbers = #tpu.dot_dimension_numbers<[1], [0], [0], [1], [0, 0, 1, 1], [], []>} : vector<1x128xbf16>, vector<128x384xbf16>, vector<1x384xf32> -> vector<1x384xf32>
    %177 = vector.extract_strided_slice %11 {offsets = [5, 0], sizes = [1, 384], strides = [1, 1]} : vector<8x768xf32> to vector<1x384xf32>
    %178 = vector.extract_strided_slice %177 {offsets = [0, 0], sizes = [1, 128], strides = [1, 1]} : vector<1x384xf32> to vector<1x128xf32>
    %179 = vector.extract_strided_slice %176 {offsets = [0, 0], sizes = [1, 128], strides = [1, 1]} : vector<1x384xf32> to vector<1x128xf32>
    %180 = arith.addf %178, %179 : vector<1x128xf32>
    %181 = arith.negf %180 : vector<1x128xf32>
    %182 = math.exp %181 : vector<1x128xf32>
    %cst_35 = arith.constant 1.000000e+00 : f32
    %183 = vector.broadcast %cst_35 : f32 to vector<1x128xf32>
    %184 = arith.addf %183, %182 : vector<1x128xf32>
    %185 = arith.divf %183, %184 : vector<1x128xf32>
    %186 = vector.extract_strided_slice %177 {offsets = [0, 128], sizes = [1, 128], strides = [1, 1]} : vector<1x384xf32> to vector<1x128xf32>
    %187 = vector.extract_strided_slice %176 {offsets = [0, 128], sizes = [1, 128], strides = [1, 1]} : vector<1x384xf32> to vector<1x128xf32>
    %188 = arith.addf %186, %187 : vector<1x128xf32>
    %189 = arith.negf %188 : vector<1x128xf32>
    %190 = math.exp %189 : vector<1x128xf32>
    %cst_36 = arith.constant 1.000000e+00 : f32
    %191 = vector.broadcast %cst_36 : f32 to vector<1x128xf32>
    %192 = arith.addf %191, %190 : vector<1x128xf32>
    %193 = arith.divf %191, %192 : vector<1x128xf32>
    %194 = vector.extract_strided_slice %177 {offsets = [0, 256], sizes = [1, 128], strides = [1, 1]} : vector<1x384xf32> to vector<1x128xf32>
    %195 = vector.extract_strided_slice %176 {offsets = [0, 256], sizes = [1, 128], strides = [1, 1]} : vector<1x384xf32> to vector<1x128xf32>
    %196 = arith.addf %195, %6 : vector<1x128xf32>
    %197 = arith.mulf %185, %196 : vector<1x128xf32>
    %198 = arith.addf %194, %197 : vector<1x128xf32>
    %199 = math.tanh %198 : vector<1x128xf32>
    %cst_37 = arith.constant 1.000000e+00 : f32
    %200 = vector.broadcast %cst_37 : f32 to vector<1x128xf32>
    %201 = arith.subf %200, %193 : vector<1x128xf32>
    %202 = arith.mulf %201, %199 : vector<1x128xf32>
    %203 = arith.mulf %193, %174 : vector<1x128xf32>
    %204 = arith.addf %202, %203 : vector<1x128xf32>
    %205 = arith.truncf %204 : vector<1x128xf32> to vector<1x128xbf16>
    %cst_38 = arith.constant dense<0.000000e+00> : vector<1x384xf32>
    %206 = tpu.matmul %205, %2, %cst_38 {dimension_numbers = #tpu.dot_dimension_numbers<[1], [0], [0], [1], [0, 0, 1, 1], [], []>} : vector<1x128xbf16>, vector<128x384xbf16>, vector<1x384xf32> -> vector<1x384xf32>
    %207 = vector.extract_strided_slice %11 {offsets = [6, 0], sizes = [1, 384], strides = [1, 1]} : vector<8x768xf32> to vector<1x384xf32>
    %208 = vector.extract_strided_slice %207 {offsets = [0, 0], sizes = [1, 128], strides = [1, 1]} : vector<1x384xf32> to vector<1x128xf32>
    %209 = vector.extract_strided_slice %206 {offsets = [0, 0], sizes = [1, 128], strides = [1, 1]} : vector<1x384xf32> to vector<1x128xf32>
    %210 = arith.addf %208, %209 : vector<1x128xf32>
    %211 = arith.negf %210 : vector<1x128xf32>
    %212 = math.exp %211 : vector<1x128xf32>
    %cst_39 = arith.constant 1.000000e+00 : f32
    %213 = vector.broadcast %cst_39 : f32 to vector<1x128xf32>
    %214 = arith.addf %213, %212 : vector<1x128xf32>
    %215 = arith.divf %213, %214 : vector<1x128xf32>
    %216 = vector.extract_strided_slice %207 {offsets = [0, 128], sizes = [1, 128], strides = [1, 1]} : vector<1x384xf32> to vector<1x128xf32>
    %217 = vector.extract_strided_slice %206 {offsets = [0, 128], sizes = [1, 128], strides = [1, 1]} : vector<1x384xf32> to vector<1x128xf32>
    %218 = arith.addf %216, %217 : vector<1x128xf32>
    %219 = arith.negf %218 : vector<1x128xf32>
    %220 = math.exp %219 : vector<1x128xf32>
    %cst_40 = arith.constant 1.000000e+00 : f32
    %221 = vector.broadcast %cst_40 : f32 to vector<1x128xf32>
    %222 = arith.addf %221, %220 : vector<1x128xf32>
    %223 = arith.divf %221, %222 : vector<1x128xf32>
    %224 = vector.extract_strided_slice %207 {offsets = [0, 256], sizes = [1, 128], strides = [1, 1]} : vector<1x384xf32> to vector<1x128xf32>
    %225 = vector.extract_strided_slice %206 {offsets = [0, 256], sizes = [1, 128], strides = [1, 1]} : vector<1x384xf32> to vector<1x128xf32>
    %226 = arith.addf %225, %6 : vector<1x128xf32>
    %227 = arith.mulf %215, %226 : vector<1x128xf32>
    %228 = arith.addf %224, %227 : vector<1x128xf32>
    %229 = math.tanh %228 : vector<1x128xf32>
    %cst_41 = arith.constant 1.000000e+00 : f32
    %230 = vector.broadcast %cst_41 : f32 to vector<1x128xf32>
    %231 = arith.subf %230, %223 : vector<1x128xf32>
    %232 = arith.mulf %231, %229 : vector<1x128xf32>
    %233 = arith.mulf %223, %204 : vector<1x128xf32>
    %234 = arith.addf %232, %233 : vector<1x128xf32>
    %235 = arith.truncf %234 : vector<1x128xf32> to vector<1x128xbf16>
    %cst_42 = arith.constant dense<0.000000e+00> : vector<1x384xf32>
    %236 = tpu.matmul %235, %2, %cst_42 {dimension_numbers = #tpu.dot_dimension_numbers<[1], [0], [0], [1], [0, 0, 1, 1], [], []>} : vector<1x128xbf16>, vector<128x384xbf16>, vector<1x384xf32> -> vector<1x384xf32>
    %237 = vector.extract_strided_slice %11 {offsets = [7, 0], sizes = [1, 384], strides = [1, 1]} : vector<8x768xf32> to vector<1x384xf32>
    %238 = vector.extract_strided_slice %237 {offsets = [0, 0], sizes = [1, 128], strides = [1, 1]} : vector<1x384xf32> to vector<1x128xf32>
    %239 = vector.extract_strided_slice %236 {offsets = [0, 0], sizes = [1, 128], strides = [1, 1]} : vector<1x384xf32> to vector<1x128xf32>
    %240 = arith.addf %238, %239 : vector<1x128xf32>
    %241 = arith.negf %240 : vector<1x128xf32>
    %242 = math.exp %241 : vector<1x128xf32>
    %cst_43 = arith.constant 1.000000e+00 : f32
    %243 = vector.broadcast %cst_43 : f32 to vector<1x128xf32>
    %244 = arith.addf %243, %242 : vector<1x128xf32>
    %245 = arith.divf %243, %244 : vector<1x128xf32>
    %246 = vector.extract_strided_slice %237 {offsets = [0, 128], sizes = [1, 128], strides = [1, 1]} : vector<1x384xf32> to vector<1x128xf32>
    %247 = vector.extract_strided_slice %236 {offsets = [0, 128], sizes = [1, 128], strides = [1, 1]} : vector<1x384xf32> to vector<1x128xf32>
    %248 = arith.addf %246, %247 : vector<1x128xf32>
    %249 = arith.negf %248 : vector<1x128xf32>
    %250 = math.exp %249 : vector<1x128xf32>
    %cst_44 = arith.constant 1.000000e+00 : f32
    %251 = vector.broadcast %cst_44 : f32 to vector<1x128xf32>
    %252 = arith.addf %251, %250 : vector<1x128xf32>
    %253 = arith.divf %251, %252 : vector<1x128xf32>
    %254 = vector.extract_strided_slice %237 {offsets = [0, 256], sizes = [1, 128], strides = [1, 1]} : vector<1x384xf32> to vector<1x128xf32>
    %255 = vector.extract_strided_slice %236 {offsets = [0, 256], sizes = [1, 128], strides = [1, 1]} : vector<1x384xf32> to vector<1x128xf32>
    %256 = arith.addf %255, %6 : vector<1x128xf32>
    %257 = arith.mulf %245, %256 : vector<1x128xf32>
    %258 = arith.addf %254, %257 : vector<1x128xf32>
    %259 = math.tanh %258 : vector<1x128xf32>
    %cst_45 = arith.constant 1.000000e+00 : f32
    %260 = vector.broadcast %cst_45 : f32 to vector<1x128xf32>
    %261 = arith.subf %260, %253 : vector<1x128xf32>
    %262 = arith.mulf %261, %259 : vector<1x128xf32>
    %263 = arith.mulf %253, %234 : vector<1x128xf32>
    %264 = arith.addf %262, %263 : vector<1x128xf32>
    %265 = arith.truncf %264 : vector<1x128xf32> to vector<1x128xbf16>
    %cst_46 = arith.constant dense<0.000000e+00> : vector<1x8xf32>
    %266 = tpu.matmul %265, %3, %cst_46 {dimension_numbers = #tpu.dot_dimension_numbers<[1], [0], [0], [1], [0, 0, 1, 1], [], []>} : vector<1x128xbf16>, vector<128x8xbf16>, vector<1x8xf32> -> vector<1x8xf32>
    %267 = arith.addf %266, %34 : vector<1x8xf32>
    %c0_47 = arith.constant 0 : index
    %c0_48 = arith.constant 0 : index
    %268 = vector.load %arg3[%c0_47, %c0_48] : memref<1x8xf32, #tpu.memory_space<vmem>>, vector<1x8xf32>
    tpu.vector_store %arg3[%c0_47, %c0_48], %267 {strides = array<i32>} : memref<1x8xf32, #tpu.memory_space<vmem>>, vector<1x8xf32>,
    return
  }
}

</mosaic_0001>

<llo_original>
// kernel: tpu_custom_call.1
$region0: #{tpu_custom_call.1}
  #allocation0 [shape = 'u32[]', space=smem, size = 0x4, offset = 0x4, fixed_abs, tag = 'smem constant byte address 0x4 - core index']
  #allocation1 [shape = 'u32[144,128]{1,0:T(1,128)}', space=vmem, size = 0x12000, scoped, tag = 'internal scratch']
  %s0 = inlined_call_operand.hbm [shape: bf16[8,16], index: 0, kind: input, shape index: {}]
  %s1 = inlined_call_operand.hbm [shape: bf16[144,768], index: 1, kind: input, shape index: {}]
  %s2 = inlined_call_operand.hbm [shape: f32[8,768], index: 2, kind: input, shape index: {}]
  %s3 = inlined_call_operand.hbm [shape: f32[1,8], index: 3, kind: output, shape index: {}]
  %s4 = sld [smem:[#allocation0]]
  $region34: #{tpu_custom_call.1} parent=0
    _
  %s6 = ssub.s32 1, %s4
  %s7 = scalar_select 0, %s6, %s4
  $region1: #{tpu_custom_call.1} parent=0
    #allocation2 [shape = 'u8[2048]{0}', space=vmem, size = 0x800, scoped, tag = 'input window, operand 0, single buffered']
    #allocation3 [shape = 's32[1]{0}', space=sflag, size = 0x4, scoped, tag = 'scoped memory for tpu_custom_call.1']
    #allocation4 [shape = 's32[1]{0}', space=sflag, size = 0x4, scoped, tag = 'scoped memory for tpu_custom_call.1']
    #allocation5 [shape = 'u8[221184]{0}', space=vmem, size = 0x36000, scoped, tag = 'input window, operand 1, single buffered']
    #allocation6 [shape = 's32[1]{0}', space=sflag, size = 0x4, scoped, tag = 'scoped memory for tpu_custom_call.1']
    #allocation7 [shape = 'u8[24576]{0}', space=vmem, size = 0x6000, scoped, tag = 'input window, operand 2, single buffered']
    #allocation8 [shape = 'u8[512]{0}', space=vmem, size = 0x400, scoped, tag = 'output window, operand 0, single buffered']
    %8 = vsyncpa [#allocation3], 0
    %9 = vsyncpa [#allocation6], 0
    %10 = vsyncpa [#allocation4], 0
    // Predicated region
    $region2: #{tpu_custom_call.1} parent=1 // pred_check
      _
    $region3: #{tpu_custom_call.1} parent=1 // pred_check_branch
      %12 = sbr.rel (0) target = $region5
    $region4: #{tpu_custom_call.1} parent=1 // pred_region
      %s14 = ssub.s32 64, 64
      %15 = vsyncadd [#allocation3], %s14
      %s17 = sshll.u32 [#allocation2], 4
      %s18 = int_to_ptr.vmem [resolvable:$true] %s17
      %20 = dma.hbm_to_vmem [thread:$0]  %s0, 64, %s18, [#allocation3]
    $region5: #{tpu_custom_call.1} parent=1 // pred_fallthru
      _
    // Predicated region
    $region6: #{tpu_custom_call.1} parent=1 // pred_check
      _
    $region7: #{tpu_custom_call.1} parent=1 // pred_check_branch
      %22 = sbr.rel (0) target = $region9
    $region8: #{tpu_custom_call.1} parent=1 // pred_region
      %s24 = ssub.s32 6912, 6912
      %25 = vsyncadd [#allocation6], %s24
      %s26 = sshll.u32 [#allocation5], 4
      %s27 = int_to_ptr.vmem [resolvable:$true] %s26
      %32 = dma.hbm_to_vmem [thread:$0]  %s1, 6912, %s27, [#allocation6], 384, 384, 24
    $region9: #{tpu_custom_call.1} parent=1 // pred_fallthru
      _
    // Predicated region
    $region10: #{tpu_custom_call.1} parent=1 // pred_check
      _
    $region11: #{tpu_custom_call.1} parent=1 // pred_check_branch
      %34 = sbr.rel (0) target = $region13
    $region12: #{tpu_custom_call.1} parent=1 // pred_region
      %s36 = ssub.s32 768, 768
      %37 = vsyncadd [#allocation6], %s36
      %s39 = sshll.u32 [#allocation7], 4
      %s40 = int_to_ptr.vmem [resolvable:$true] %s39
      %42 = dma.hbm_to_vmem [thread:$0]  %s2, 768, %s40, [#allocation6]
    $region13: #{tpu_custom_call.1} parent=1 // pred_fallthru
      _
    // Predicated region
    $region14: #{tpu_custom_call.1} parent=1 // pred_check
      _
    $region15: #{tpu_custom_call.1} parent=1 // pred_check_branch
      %44 = sbr.rel (0) target = $region17
    $region16: #{tpu_custom_call.1} parent=1 // pred_region
      %45 = dma.done [#allocation3], 64
    $region17: #{tpu_custom_call.1} parent=1 // pred_fallthru
      _
    // Predicated region
    $region18: #{tpu_custom_call.1} parent=1 // pred_check
      _
    $region19: #{tpu_custom_call.1} parent=1 // pred_check_branch
      %47 = sbr.rel (0) target = $region21
    $region20: #{tpu_custom_call.1} parent=1 // pred_region
      %48 = dma.done [#allocation6], 6912
    $region21: #{tpu_custom_call.1} parent=1 // pred_fallthru
      _
    // Predicated region
    $region22: #{tpu_custom_call.1} parent=1 // pred_check
      _
    $region23: #{tpu_custom_call.1} parent=1 // pred_check_branch
      %50 = sbr.rel (0) target = $region25
    $region24: #{tpu_custom_call.1} parent=1 // pred_region
      %51 = dma.done [#allocation6], 768
    $region25: #{tpu_custom_call.1} parent=1 // pred_fallthru
      _
    %v53 = vld [vmem:[#allocation2] sm:$0xf]
    %v54 = vld [vmem:[#allocation5] sm:$0xff]
    %v55 = vld [vmem:[#allocation5 + $0x8] sm:$0xff]
    %v56 = vld [vmem:[#allocation5 + $0x10] sm:$0xff]
    %v57 = vld [vmem:[#allocation5 + $0x18] sm:$0xff]
    %v58 = vld [vmem:[#allocation5 + $0x20] sm:$0xff]
    %v59 = vld [vmem:[#allocation5 + $0x28] sm:$0xff]
    %v60 = vld [vmem:[#allocation5 + $0x30] sm:$0xff]
    %v61 = vld [vmem:[#allocation5 + $0x38] sm:$0xf]
    %v62 = vld [vmem:[#allocation5 + $0x48] sm:$0xff]
    %v63 = vld [vmem:[#allocation5 + $0x50] sm:$0xf]
    %v64 = vld [vmem:[#allocation5 + $0x60] sm:$0xff]
    %v65 = vld [vmem:[#allocation5 + $0x68] sm:$0xf]
    %v66 = vld [vmem:[#allocation5 + $0x78] sm:$0xff]
    %v67 = vld [vmem:[#allocation5 + $0x80] sm:$0xf]
    %v68 = vld [vmem:[#allocation5 + $0x90] sm:$0xff]
    %v69 = vld [vmem:[#allocation5 + $0x98] sm:$0xf]
    %v70 = vld [vmem:[#allocation5 + $0xa8] sm:$0xff]
    %v71 = vld [vmem:[#allocation5 + $0xb0] sm:$0xf]
    %v72 = vld [vmem:[#allocation5 + $0xc0] sm:$0xff]
    %v73 = vld [vmem:[#allocation5 + $0xc8] sm:$0xf]
    %v74 = vld [vmem:[#allocation5 + $0xd8] sm:$0xff]
    %v75 = vld [vmem:[#allocation5 + $0xe0] sm:$0xf]
    %v76 = vld [vmem:[#allocation5 + $0xf0] sm:$0xff]
    %v77 = vld [vmem:[#allocation5 + $0xf8] sm:$0xf]
    %v78 = vld [vmem:[#allocation5 + $0x108] sm:$0xff]
    %v79 = vld [vmem:[#allocation5 + $0x110] sm:$0xf]
    %v80 = vld [vmem:[#allocation5 + $0x120] sm:$0xff]
    %v81 = vld [vmem:[#allocation5 + $0x128] sm:$0xf]
    %v82 = vld [vmem:[#allocation5 + $0x138] sm:$0xff]
    %v83 = vld [vmem:[#allocation5 + $0x140] sm:$0xf]
    %v84 = vld [vmem:[#allocation5 + $0x150] sm:$0xff]
    %v85 = vld [vmem:[#allocation5 + $0x158] sm:$0xf]
    %v86 = vld [vmem:[#allocation5 + $0x168] sm:$0xff]
    %v87 = vld [vmem:[#allocation5 + $0x170] sm:$0xf]
    %v88 = vld [vmem:[#allocation5 + $0x180] sm:$0xff]
    %v89 = vld [vmem:[#allocation5 + $0x188] sm:$0xf]
    %v90 = vld [vmem:[#allocation5 + $0x198] sm:$0xff]
    %v91 = vld [vmem:[#allocation5 + $0x1a0] sm:$0xf]
    %v92 = vld [vmem:[#allocation5 + $0x3c] sm:$0xf]
    %v93 = vld [vmem:[#allocation5 + $0x54] sm:$0xf]
    %v94 = vld [vmem:[#allocation5 + $0x6c] sm:$0xf]
    %v95 = vld [vmem:[#allocation5 + $0x84] sm:$0xf]
    %v96 = vld [vmem:[#allocation5 + $0x9c] sm:$0xf]
    %v97 = vld [vmem:[#allocation5 + $0xb4] sm:$0xf]
    %v98 = vld [vmem:[#allocation5 + $0xcc] sm:$0xf]
    %v99 = vld [vmem:[#allocation5 + $0xe4] sm:$0xf]
    %v100 = vld [vmem:[#allocation5 + $0xfc] sm:$0xf]
    %v101 = vld [vmem:[#allocation5 + $0x114] sm:$0xf]
    %v102 = vld [vmem:[#allocation5 + $0x12c] sm:$0xf]
    %v103 = vld [vmem:[#allocation5 + $0x144] sm:$0xf]
    %v104 = vld [vmem:[#allocation5 + $0x15c] sm:$0xf]
    %v105 = vld [vmem:[#allocation5 + $0x174] sm:$0xf]
    %v106 = vld [vmem:[#allocation5 + $0x18c] sm:$0xf]
    %v107 = vld [vmem:[#allocation5 + $0x1a4] sm:$0xf]
    %v108 = vld [vmem:[#allocation5 + $0x40] sm:$0xf]
    %v109 = vld [vmem:[#allocation5 + $0x58] sm:$0xf]
    %v110 = vld [vmem:[#allocation5 + $0x70] sm:$0xf]
    %v111 = vld [vmem:[#allocation5 + $0x88] sm:$0xf]
    %v112 = vld [vmem:[#allocation5 + $0xa0] sm:$0xf]
    %v113 = vld [vmem:[#allocation5 + $0xb8] sm:$0xf]
    %v114 = vld [vmem:[#allocation5 + $0xd0] sm:$0xf]
    %v115 = vld [vmem:[#allocation5 + $0xe8] sm:$0xf]
    %v116 = vld [vmem:[#allocation5 + $0x100] sm:$0xf]
    %v117 = vld [vmem:[#allocation5 + $0x118] sm:$0xf]
    %v118 = vld [vmem:[#allocation5 + $0x130] sm:$0xf]
    %v119 = vld [vmem:[#allocation5 + $0x148] sm:$0xf]
    %v120 = vld [vmem:[#allocation5 + $0x160] sm:$0xf]
    %v121 = vld [vmem:[#allocation5 + $0x178] sm:$0xf]
    %v122 = vld [vmem:[#allocation5 + $0x190] sm:$0xf]
    %v123 = vld [vmem:[#allocation5 + $0x1a8] sm:$0xf]
    %v124 = vld [vmem:[#allocation7] ss:$8 sm:$0xf]
    %v125 = vld [vmem:[#allocation7] ss:$8 sm:$0x30]
    %v126 = vor.u32 %v124, %v125
    %v127 = vld [vmem:[#allocation7 + $0x1] ss:$0 sm:$0xff]
    %v128 = vld [vmem:[#allocation7 + $0x2] ss:$0 sm:$0xff]
    %v129 = vld [vmem:[#allocation7 + $0x3] ss:$0 sm:$0xff]
    %v131 = vlaneseq
    %v132 = vshrl.u32 %v131, 7
    %v133 = vsub.s32 0, %v132
    %v134 = vrot.slane %v126, %v133
    %v135 = vlaneseq
    %v136 = vshrl.u32 %v135, 7
    %v137 = vsub.s32 1, %v136
    %v138 = vrot.slane %v126, %v137
    %v139 = vlaneseq
    %v140 = vshrl.u32 %v139, 7
    %v141 = vsub.s32 2, %v140
    %v142 = vrot.slane %v126, %v141
    %v143 = vlaneseq
    %v144 = vshrl.u32 %v143, 7
    %v145 = vsub.s32 3, %v144
    %v146 = vrot.slane %v126, %v145
    %v147 = vlaneseq
    %v148 = vshrl.u32 %v147, 7
    %v149 = vsub.s32 4, %v148
    %v150 = vrot.slane %v126, %v149
    %v151 = vlaneseq
    %v152 = vshrl.u32 %v151, 7
    %v153 = vsub.s32 5, %v152
    %v154 = vrot.slane %v126, %v153
    %v167 = vunpack.c.l.b16 %v54
    %v168 = vunpack.c.h.b16 %v54
    %v169 = vunpack.c.l.b16 %v55
    %v170 = vunpack.c.h.b16 %v55
    %v171 = vunpack.c.l.b16 %v56
    %v172 = vunpack.c.h.b16 %v56
    %v173 = vunpack.c.l.b16 %v57
    %v174 = vunpack.c.h.b16 %v57
    %v175 = vunpack.c.l.b16 %v58
    %v176 = vunpack.c.h.b16 %v58
    %v177 = vunpack.c.l.b16 %v59
    %v178 = vunpack.c.h.b16 %v59
    %v179 = vpack.c.b16 %v173, %v167
    %v180 = vpack.c.b16 %v174, %v168
    %v181 = vpack.c.b16 %v175, %v169
    %v182 = vpack.c.b16 %v176, %v170
    %v183 = vpack.c.b16 %v177, %v171
    %v184 = vpack.c.b16 %v178, %v172
    %vm191 = vcmask 130048
    %v193 = vsel %vm191, %v53, 0
    %195 = vmatprep.subr.bf16.mxu0 0
    %196 = vmatpush1.bf16.msra.mxu0 0
    %197 = vmatprep.subr.bf16.mxu0 0
    %198 = vmatpush1.bf16.msra.mxu0 0
    %199 = vmatprep.subr.bf16.mxu0 0
    %200 = vmatpush1.bf16.msra.mxu0 0
    %201 = vmatprep.subr.bf16.mxu0 0
    %202 = vmatpush1.bf16.msra.mxu0 0
    %203 = vmatprep.subr.bf16.mxu0 0
    %204 = vmatpush1.bf16.msra.mxu0 0
    %205 = vmatprep.subr.bf16.mxu0 0
    %206 = vmatpush1.bf16.msra.mxu0 0
    %207 = vmatprep.subr.bf16.mxu0 0
    %208 = vmatpush1.bf16.msra.mxu0 0
    %209 = vmatprep.subr.bf16.mxu0 %v180
    %210 = vmatpush1.bf16.msra.mxu0 %v179
    %211 = vmatprep.subr.bf16.mxu0 0
    %212 = vmatpush2.bf16.msra.mxu0 0
    %213 = vmatprep.subr.bf16.mxu0 0
    %214 = vmatpush2.bf16.msra.mxu0 0
    %215 = vmatprep.subr.bf16.mxu0 0
    %216 = vmatpush2.bf16.msra.mxu0 0
    %217 = vmatprep.subr.bf16.mxu0 0
    %218 = vmatpush2.bf16.msra.mxu0 0
    %219 = vmatprep.subr.bf16.mxu0 0
    %220 = vmatpush2.bf16.msra.mxu0 0
    %221 = vmatprep.subr.bf16.mxu0 0
    %222 = vmatpush2.bf16.msra.mxu0 0
    %223 = vmatprep.subr.bf16.mxu0 0
    %224 = vmatpush2.bf16.msra.mxu0 0
    %225 = vmatprep.subr.bf16.mxu0 0
    %226 = vmatpush2.bf16.msra.mxu0 0
    %227 = vmatprep.mubr.bf16.mxu0 0
    %228 = vmatmul.mubr.bf16.gmra.mxu0 %v193
    %v229 = vpop.f32.mrf.mxu0
    %v230 = vadd.f32 %v134, %v229
    %v231 = vpop.f32.mrf.mxu0
    %v232 = vadd.f32 %v138, %v231
    %v233 = vpop.f32.mrf.mxu0
    %v234 = vpop.f32.mrf.mxu0
    %235 = vdwg.mxu0
    %236 = vmatprep.subr.bf16.mxu0 0
    %237 = vmatpush1.bf16.msra.mxu0 0
    %238 = vmatprep.subr.bf16.mxu0 0
    %239 = vmatpush1.bf16.msra.mxu0 0
    %240 = vmatprep.subr.bf16.mxu0 0
    %241 = vmatpush1.bf16.msra.mxu0 0
    %242 = vmatprep.subr.bf16.mxu0 0
    %243 = vmatpush1.bf16.msra.mxu0 0
    %244 = vmatprep.subr.bf16.mxu0 0
    %245 = vmatpush1.bf16.msra.mxu0 0
    %246 = vmatprep.subr.bf16.mxu0 0
    %247 = vmatpush1.bf16.msra.mxu0 0
    %248 = vmatprep.subr.bf16.mxu0 0
    %249 = vmatpush1.bf16.msra.mxu0 0
    %250 = vmatprep.subr.bf16.mxu0 %v182
    %251 = vmatpush1.bf16.msra.mxu0 %v181
    %252 = vmatprep.subr.bf16.mxu0 0
    %253 = vmatpush2.bf16.msra.mxu0 0
    %254 = vmatprep.subr.bf16.mxu0 0
    %255 = vmatpush2.bf16.msra.mxu0 0
    %256 = vmatprep.subr.bf16.mxu0 0
    %257 = vmatpush2.bf16.msra.mxu0 0
    %258 = vmatprep.subr.bf16.mxu0 0
    %259 = vmatpush2.bf16.msra.mxu0 0
    %260 = vmatprep.subr.bf16.mxu0 0
    %261 = vmatpush2.bf16.msra.mxu0 0
    %262 = vmatprep.subr.bf16.mxu0 0
    %263 = vmatpush2.bf16.msra.mxu0 0
    %264 = vmatprep.subr.bf16.mxu0 0
    %265 = vmatpush2.bf16.msra.mxu0 0
    %266 = vmatprep.subr.bf16.mxu0 0
    %267 = vmatpush2.bf16.msra.mxu0 0
    %268 = vmatprep.mubr.bf16.mxu0 0
    %269 = vmatmul.mubr.bf16.gmra.mxu0 %v193
    %v270 = vpop.f32.mrf.mxu0
    %v271 = vadd.f32 %v142, %v270
    %v272 = vpop.f32.mrf.mxu0
    %v273 = vadd.f32 %v146, %v272
    %v274 = vpop.f32.mrf.mxu0
    %v275 = vpop.f32.mrf.mxu0
    %276 = vdwg.mxu0
    %277 = vmatprep.subr.bf16.mxu0 0
    %278 = vmatpush1.bf16.msra.mxu0 0
    %279 = vmatprep.subr.bf16.mxu0 0
    %280 = vmatpush1.bf16.msra.mxu0 0
    %281 = vmatprep.subr.bf16.mxu0 0
    %282 = vmatpush1.bf16.msra.mxu0 0
    %283 = vmatprep.subr.bf16.mxu0 0
    %284 = vmatpush1.bf16.msra.mxu0 0
    %285 = vmatprep.subr.bf16.mxu0 0
    %286 = vmatpush1.bf16.msra.mxu0 0
    %287 = vmatprep.subr.bf16.mxu0 0
    %288 = vmatpush1.bf16.msra.mxu0 0
    %289 = vmatprep.subr.bf16.mxu0 0
    %290 = vmatpush1.bf16.msra.mxu0 0
    %291 = vmatprep.subr.bf16.mxu0 %v184
    %292 = vmatpush1.bf16.msra.mxu0 %v183
    %293 = vmatprep.subr.bf16.mxu0 0
    %294 = vmatpush2.bf16.msra.mxu0 0
    %295 = vmatprep.subr.bf16.mxu0 0
    %296 = vmatpush2.bf16.msra.mxu0 0
    %297 = vmatprep.subr.bf16.mxu0 0
    %298 = vmatpush2.bf16.msra.mxu0 0
    %299 = vmatprep.subr.bf16.mxu0 0
    %300 = vmatpush2.bf16.msra.mxu0 0
    %301 = vmatprep.subr.bf16.mxu0 0
    %302 = vmatpush2.bf16.msra.mxu0 0
    %303 = vmatprep.subr.bf16.mxu0 0
    %304 = vmatpush2.bf16.msra.mxu0 0
    %305 = vmatprep.subr.bf16.mxu0 0
    %306 = vmatpush2.bf16.msra.mxu0 0
    %307 = vmatprep.subr.bf16.mxu0 0
    %308 = vmatpush2.bf16.msra.mxu0 0
    %309 = vmatprep.mubr.bf16.mxu0 0
    %310 = vmatmul.mubr.bf16.gmra.mxu0 %v193
    %v311 = vpop.f32.mrf.mxu0
    %v312 = vadd.f32 %v150, %v311
    %v313 = vpop.f32.mrf.mxu0
    %v314 = vadd.f32 %v154, %v313
    %v315 = vpop.f32.mrf.mxu0
    %v316 = vpop.f32.mrf.mxu0
    %317 = vdwg.mxu0
    %v318 = vxor.u32 %v273, 2147483648
    %v319 = vmul.f32 %v318, 1.442695
    %v320 = vpow.pop %v319
    %v321 = vadd.f32 %v320, 1.0
    %v322 = vrcp.pop %v321
    %v323 = vmul.f32 1.0, %v322
    %v324 = vxor.u32 %v312, 2147483648
    %v325 = vmul.f32 %v324, 1.442695
    %v326 = vpow.pop %v325
    %v327 = vadd.f32 %v326, 1.0
    %v328 = vrcp.pop %v327
    %v329 = vmul.f32 1.0, %v328
    %v330 = vmul.f32 %v323, %v128
    %v331 = vadd.f32 %v314, %v330
    %v332 = vtanh.pop %v331
    %v333 = vsub.f32 1.0, %v329
    %v334 = vmul.f32 %v333, %v332
    %v335 = vpack.c.bf16 %v334, %v334
    %v337 = vshrl.u32 %v335, 16
    %v339 = vrot.slane %v337, 3
    %v357 = vunpack.c.l.b16 %v108
    %v358 = vunpack.c.l.b16 %v109
    %v359 = vunpack.c.l.b16 %v110
    %v360 = vunpack.c.l.b16 %v111
    %v361 = vunpack.c.l.b16 %v112
    %v362 = vunpack.c.l.b16 %v113
    %v363 = vunpack.c.l.b16 %v114
    %v364 = vunpack.c.l.b16 %v115
    %v365 = vunpack.c.l.b16 %v116
    %v366 = vunpack.c.l.b16 %v117
    %v367 = vunpack.c.l.b16 %v118
    %v368 = vunpack.c.l.b16 %v119
    %v369 = vunpack.c.l.b16 %v120
    %v370 = vunpack.c.l.b16 %v121
    %v371 = vunpack.c.l.b16 %v122
    %v372 = vunpack.c.l.b16 %v123
    %v373 = vpack.c.b16 %v358, %v357
    %v374 = vpack.c.b16 %v360, %v359
    %v375 = vpack.c.b16 %v362, %v361
    %v376 = vpack.c.b16 %v364, %v363
    %v377 = vpack.c.b16 %v366, %v365
    %v378 = vpack.c.b16 %v368, %v367
    %v379 = vpack.c.b16 %v370, %v369
    %v380 = vpack.c.b16 %v372, %v371
    %389 = vmatprep.subr.bf16.mxu0 0
    %390 = vmatpush1.bf16.msra.mxu0 %v380
    %391 = vmatprep.subr.bf16.mxu0 0
    %392 = vmatpush1.bf16.msra.mxu0 %v379
    %393 = vmatprep.subr.bf16.mxu0 0
    %394 = vmatpush1.bf16.msra.mxu0 %v378
    %395 = vmatprep.subr.bf16.mxu0 0
    %396 = vmatpush1.bf16.msra.mxu0 %v377
    %397 = vmatprep.subr.bf16.mxu0 0
    %398 = vmatpush1.bf16.msra.mxu0 %v376
    %399 = vmatprep.subr.bf16.mxu0 0
    %400 = vmatpush1.bf16.msra.mxu0 %v375
    %401 = vmatprep.subr.bf16.mxu0 0
    %402 = vmatpush1.bf16.msra.mxu0 %v374
    %403 = vmatprep.subr.bf16.mxu0 0
    %404 = vmatpush1.bf16.msra.mxu0 %v373
    %405 = vmatprep.subr.bf16.mxu0 0
    %406 = vmatpush2.bf16.msra.mxu0 0
    %407 = vmatprep.subr.bf16.mxu0 0
    %408 = vmatpush2.bf16.msra.mxu0 0
    %409 = vmatprep.subr.bf16.mxu0 0
    %410 = vmatpush2.bf16.msra.mxu0 0
    %411 = vmatprep.subr.bf16.mxu0 0
    %412 = vmatpush2.bf16.msra.mxu0 0
    %413 = vmatprep.subr.bf16.mxu0 0
    %414 = vmatpush2.bf16.msra.mxu0 0
    %415 = vmatprep.subr.bf16.mxu0 0
    %416 = vmatpush2.bf16.msra.mxu0 0
    %417 = vmatprep.subr.bf16.mxu0 0
    %418 = vmatpush2.bf16.msra.mxu0 0
    %419 = vmatprep.subr.bf16.mxu0 0
    %420 = vmatpush2.bf16.msra.mxu0 0
    %421 = vmatprep.mubr.bf16.mxu0 0
    %422 = vmatmul.mubr.bf16.gmra.mxu0 %v339
    %v423 = vpop.f32.mrf.mxu0
    %v424 = vadd.f32 %v129, %v423
    %v425 = vpop.f32.mrf.mxu0
    %v426 = vpop.f32.mrf.mxu0
    %v427 = vpop.f32.mrf.mxu0
    %428 = vdwg.mxu0
    %v429 = vxor.u32 %v230, 2147483648
    %v430 = vmul.f32 %v429, 1.442695
    %v431 = vpow.pop %v430
    %v432 = vadd.f32 %v431, 1.0
    %v433 = vrcp.pop %v432
    %v434 = vmul.f32 1.0, %v433
    %v435 = vxor.u32 %v232, 2147483648
    %v436 = vmul.f32 %v435, 1.442695
    %v437 = vpow.pop %v436
    %v438 = vadd.f32 %v437, 1.0
    %v439 = vrcp.pop %v438
    %v440 = vmul.f32 1.0, %v439
    %v441 = vmul.f32 %v434, %v127
    %v442 = vadd.f32 %v271, %v441
    %v443 = vtanh.pop %v442
    %v444 = vsub.f32 1.0, %v440
    %v445 = vmul.f32 %v444, %v443
    %v446 = vpack.c.bf16 %v445, %v445
    %v479 = vunpack.c.l.b16 %v60
    %v480 = vunpack.c.h.b16 %v60
    %v481 = vunpack.c.l.b16 %v61
    %v482 = vunpack.c.l.b16 %v62
    %v483 = vunpack.c.h.b16 %v62
    %v484 = vunpack.c.l.b16 %v63
    %v485 = vunpack.c.l.b16 %v64
    %v486 = vunpack.c.h.b16 %v64
    %v487 = vunpack.c.l.b16 %v65
    %v488 = vunpack.c.l.b16 %v66
    %v489 = vunpack.c.h.b16 %v66
    %v490 = vunpack.c.l.b16 %v67
    %v491 = vunpack.c.l.b16 %v68
    %v492 = vunpack.c.h.b16 %v68
    %v493 = vunpack.c.l.b16 %v69
    %v494 = vunpack.c.l.b16 %v70
    %v495 = vunpack.c.h.b16 %v70
    %v496 = vunpack.c.l.b16 %v71
    %v497 = vunpack.c.l.b16 %v72
    %v498 = vunpack.c.h.b16 %v72
    %v499 = vunpack.c.l.b16 %v73
    %v500 = vunpack.c.l.b16 %v74
    %v501 = vunpack.c.h.b16 %v74
    %v502 = vunpack.c.l.b16 %v75
    %v503 = vunpack.c.l.b16 %v76
    %v504 = vunpack.c.h.b16 %v76
    %v505 = vunpack.c.l.b16 %v77
    %v506 = vunpack.c.l.b16 %v78
    %v507 = vunpack.c.h.b16 %v78
    %v508 = vunpack.c.l.b16 %v79
    %v509 = vunpack.c.l.b16 %v80
    %v510 = vunpack.c.h.b16 %v80
    %v511 = vunpack.c.l.b16 %v81
    %v512 = vunpack.c.l.b16 %v82
    %v513 = vunpack.c.h.b16 %v82
    %v514 = vunpack.c.l.b16 %v83
    %v515 = vunpack.c.l.b16 %v84
    %v516 = vunpack.c.h.b16 %v84
    %v517 = vunpack.c.l.b16 %v85
    %v518 = vunpack.c.l.b16 %v86
    %v519 = vunpack.c.h.b16 %v86
    %v520 = vunpack.c.l.b16 %v87
    %v521 = vunpack.c.l.b16 %v88
    %v522 = vunpack.c.h.b16 %v88
    %v523 = vunpack.c.l.b16 %v89
    %v524 = vunpack.c.l.b16 %v90
    %v525 = vunpack.c.h.b16 %v90
    %v526 = vunpack.c.l.b16 %v91
    %v527 = vpack.c.b16 %v482, %v479
    %v528 = vpack.c.b16 %v483, %v480
    %v529 = vpack.c.b16 %v484, %v481
    %v530 = vpack.c.b16 %v488, %v485
    %v531 = vpack.c.b16 %v489, %v486
    %v532 = vpack.c.b16 %v490, %v487
    %v533 = vpack.c.b16 %v494, %v491
    %v534 = vpack.c.b16 %v495, %v492
    %v535 = vpack.c.b16 %v496, %v493
    %v536 = vpack.c.b16 %v500, %v497
    %v537 = vpack.c.b16 %v501, %v498
    %v538 = vpack.c.b16 %v502, %v499
    %v539 = vpack.c.b16 %v506, %v503
    %v540 = vpack.c.b16 %v507, %v504
    %v541 = vpack.c.b16 %v508, %v505
    %v542 = vpack.c.b16 %v512, %v509
    %v543 = vpack.c.b16 %v513, %v510
    %v544 = vpack.c.b16 %v514, %v511
    %v545 = vpack.c.b16 %v518, %v515
    %v546 = vpack.c.b16 %v519, %v516
    %v547 = vpack.c.b16 %v520, %v517
    %v548 = vpack.c.b16 %v524, %v521
    %v549 = vpack.c.b16 %v525, %v522
    %v550 = vpack.c.b16 %v526, %v523
    %575 = vmatprep.subr.bf16.mxu0 %v549
    %576 = vmatpush1.bf16.msra.mxu0 %v548
    %577 = vmatprep.subr.bf16.mxu0 %v546
    %578 = vmatpush1.bf16.msra.mxu0 %v545
    %579 = vmatprep.subr.bf16.mxu0 %v543
    %580 = vmatpush1.bf16.msra.mxu0 %v542
    %581 = vmatprep.subr.bf16.mxu0 %v540
    %582 = vmatpush1.bf16.msra.mxu0 %v539
    %583 = vmatprep.subr.bf16.mxu0 %v537
    %584 = vmatpush1.bf16.msra.mxu0 %v536
    %585 = vmatprep.subr.bf16.mxu0 %v534
    %586 = vmatpush1.bf16.msra.mxu0 %v533
    %587 = vmatprep.subr.bf16.mxu0 %v531
    %588 = vmatpush1.bf16.msra.mxu0 %v530
    %589 = vmatprep.subr.bf16.mxu0 %v528
    %590 = vmatpush1.bf16.msra.mxu0 %v527
    %591 = vmatprep.subr.bf16.mxu0 0
    %592 = vmatpush2.bf16.msra.mxu0 0
    %593 = vmatprep.subr.bf16.mxu0 0
    %594 = vmatpush2.bf16.msra.mxu0 0
    %595 = vmatprep.subr.bf16.mxu0 0
    %596 = vmatpush2.bf16.msra.mxu0 0
    %597 = vmatprep.subr.bf16.mxu0 0
    %598 = vmatpush2.bf16.msra.mxu0 0
    %599 = vmatprep.subr.bf16.mxu0 0
    %600 = vmatpush2.bf16.msra.mxu0 0
    %601 = vmatprep.subr.bf16.mxu0 0
    %602 = vmatpush2.bf16.msra.mxu0 0
    %603 = vmatprep.subr.bf16.mxu0 0
    %604 = vmatpush2.bf16.msra.mxu0 0
    %605 = vmatprep.subr.bf16.mxu0 0
    %606 = vmatpush2.bf16.msra.mxu0 0
    %607 = vmatprep.mubr.bf16.mxu0 0
    %608 = vmatmul.mubr.bf16.gmra.mxu0 %v446
    %v609 = vpop.f32.mrf.mxu0
    %v610 = vadd.f32 0.0, %v609
    %v611 = vpop.f32.mrf.mxu0
    %v612 = vadd.f32 0.0, %v611
    %v613 = vpop.f32.mrf.mxu0
    %v614 = vpop.f32.mrf.mxu0
    %615 = vdwg.mxu0
    %616 = vmatprep.subr.bf16.mxu0 0
    %617 = vmatpush1.bf16.msra.mxu0 %v550
    %618 = vmatprep.subr.bf16.mxu0 0
    %619 = vmatpush1.bf16.msra.mxu0 %v547
    %620 = vmatprep.subr.bf16.mxu0 0
    %621 = vmatpush1.bf16.msra.mxu0 %v544
    %622 = vmatprep.subr.bf16.mxu0 0
    %623 = vmatpush1.bf16.msra.mxu0 %v541
    %624 = vmatprep.subr.bf16.mxu0 0
    %625 = vmatpush1.bf16.msra.mxu0 %v538
    %626 = vmatprep.subr.bf16.mxu0 0
    %627 = vmatpush1.bf16.msra.mxu0 %v535
    %628 = vmatprep.subr.bf16.mxu0 0
    %629 = vmatpush1.bf16.msra.mxu0 %v532
    %630 = vmatprep.subr.bf16.mxu0 0
    %631 = vmatpush1.bf16.msra.mxu0 %v529
    %632 = vmatprep.subr.bf16.mxu0 0
    %633 = vmatpush2.bf16.msra.mxu0 0
    %634 = vmatprep.subr.bf16.mxu0 0
    %635 = vmatpush2.bf16.msra.mxu0 0
    %636 = vmatprep.subr.bf16.mxu0 0
    %637 = vmatpush2.bf16.msra.mxu0 0
    %638 = vmatprep.subr.bf16.mxu0 0
    %639 = vmatpush2.bf16.msra.mxu0 0
    %640 = vmatprep.subr.bf16.mxu0 0
    %641 = vmatpush2.bf16.msra.mxu0 0
    %642 = vmatprep.subr.bf16.mxu0 0
    %643 = vmatpush2.bf16.msra.mxu0 0
    %644 = vmatprep.subr.bf16.mxu0 0
    %645 = vmatpush2.bf16.msra.mxu0 0
    %646 = vmatprep.subr.bf16.mxu0 0
    %647 = vmatpush2.bf16.msra.mxu0 0
    %648 = vmatprep.mubr.bf16.mxu0 0
    %649 = vmatmul.mubr.bf16.gmra.mxu0 %v446
    %v650 = vpop.f32.mrf.mxu0
    %v651 = vadd.f32 0.0, %v650
    %v652 = vpop.f32.mrf.mxu0
    %v653 = vpop.f32.mrf.mxu0
    %v654 = vpop.f32.mrf.mxu0
    %655 = vdwg.mxu0
    %v657 = vrot.slane %v610, 7
    %v659 = vadd.f32 %v230, %v657
    %v660 = vxor.u32 %v659, 2147483648
    %v661 = vmul.f32 %v660, 1.442695
    %v662 = vpow.pop %v661
    %v663 = vadd.f32 %v662, 1.0
    %v664 = vrcp.pop %v663
    %v665 = vmul.f32 1.0, %v664
    %v667 = vrot.slane %v612, 7
    %v669 = vadd.f32 %v232, %v667
    %v670 = vxor.u32 %v669, 2147483648
    %v671 = vmul.f32 %v670, 1.442695
    %v672 = vpow.pop %v671
    %v673 = vadd.f32 %v672, 1.0
    %v674 = vrcp.pop %v673
    %v675 = vmul.f32 1.0, %v674
    %v676 = vadd.f32 %v651, %v127
    %v678 = vrot.slane %v676, 7
    %v680 = vmul.f32 %v665, %v678
    %v681 = vadd.f32 %v271, %v680
    %v682 = vtanh.pop %v681
    %v683 = vsub.f32 1.0, %v675
    %v684 = vmul.f32 %v683, %v682
    %v686 = vrot.slane %v445, 7
    %v688 = vmul.f32 %v675, %v686
    %v689 = vadd.f32 %v684, %v688
    %v690 = vpack.c.bf16 %v689, %v689
    %v692 = vshrl.u32 %v690, 16
    %695 = vmatprep.subr.bf16.mxu0 %v549
    %696 = vmatpush1.bf16.msra.mxu0 %v548
    %697 = vmatprep.subr.bf16.mxu0 %v546
    %698 = vmatpush1.bf16.msra.mxu0 %v545
    %699 = vmatprep.subr.bf16.mxu0 %v543
    %700 = vmatpush1.bf16.msra.mxu0 %v542
    %701 = vmatprep.subr.bf16.mxu0 %v540
    %702 = vmatpush1.bf16.msra.mxu0 %v539
    %703 = vmatprep.subr.bf16.mxu0 %v537
    %704 = vmatpush1.bf16.msra.mxu0 %v536
    %705 = vmatprep.subr.bf16.mxu0 %v534
    %706 = vmatpush1.bf16.msra.mxu0 %v533
    %707 = vmatprep.subr.bf16.mxu0 %v531
    %708 = vmatpush1.bf16.msra.mxu0 %v530
    %709 = vmatprep.subr.bf16.mxu0 %v528
    %710 = vmatpush1.bf16.msra.mxu0 %v527
    %711 = vmatprep.subr.bf16.mxu0 0
    %712 = vmatpush2.bf16.msra.mxu0 0
    %713 = vmatprep.subr.bf16.mxu0 0
    %714 = vmatpush2.bf16.msra.mxu0 0
    %715 = vmatprep.subr.bf16.mxu0 0
    %716 = vmatpush2.bf16.msra.mxu0 0
    %717 = vmatprep.subr.bf16.mxu0 0
    %718 = vmatpush2.bf16.msra.mxu0 0
    %719 = vmatprep.subr.bf16.mxu0 0
    %720 = vmatpush2.bf16.msra.mxu0 0
    %721 = vmatprep.subr.bf16.mxu0 0
    %722 = vmatpush2.bf16.msra.mxu0 0
    %723 = vmatprep.subr.bf16.mxu0 0
    %724 = vmatpush2.bf16.msra.mxu0 0
    %725 = vmatprep.subr.bf16.mxu0 0
    %726 = vmatpush2.bf16.msra.mxu0 0
    %727 = vmatprep.mubr.bf16.mxu0 0
    %728 = vmatmul.mubr.bf16.gmra.mxu0 %v692
    %v729 = vpop.f32.mrf.mxu0
    %v730 = vadd.f32 0.0, %v729
    %v731 = vpop.f32.mrf.mxu0
    %v732 = vadd.f32 0.0, %v731
    %v733 = vpop.f32.mrf.mxu0
    %v734 = vpop.f32.mrf.mxu0
    %735 = vdwg.mxu0
    %736 = vmatprep.subr.bf16.mxu0 0
    %737 = vmatpush1.bf16.msra.mxu0 %v550
    %738 = vmatprep.subr.bf16.mxu0 0
    %739 = vmatpush1.bf16.msra.mxu0 %v547
    %740 = vmatprep.subr.bf16.mxu0 0
    %741 = vmatpush1.bf16.msra.mxu0 %v544
    %742 = vmatprep.subr.bf16.mxu0 0
    %743 = vmatpush1.bf16.msra.mxu0 %v541
    %744 = vmatprep.subr.bf16.mxu0 0
    %745 = vmatpush1.bf16.msra.mxu0 %v538
    %746 = vmatprep.subr.bf16.mxu0 0
    %747 = vmatpush1.bf16.msra.mxu0 %v535
    %748 = vmatprep.subr.bf16.mxu0 0
    %749 = vmatpush1.bf16.msra.mxu0 %v532
    %750 = vmatprep.subr.bf16.mxu0 0
    %751 = vmatpush1.bf16.msra.mxu0 %v529
    %752 = vmatprep.subr.bf16.mxu0 0
    %753 = vmatpush2.bf16.msra.mxu0 0
    %754 = vmatprep.subr.bf16.mxu0 0
    %755 = vmatpush2.bf16.msra.mxu0 0
    %756 = vmatprep.subr.bf16.mxu0 0
    %757 = vmatpush2.bf16.msra.mxu0 0
    %758 = vmatprep.subr.bf16.mxu0 0
    %759 = vmatpush2.bf16.msra.mxu0 0
    %760 = vmatprep.subr.bf16.mxu0 0
    %761 = vmatpush2.bf16.msra.mxu0 0
    %762 = vmatprep.subr.bf16.mxu0 0
    %763 = vmatpush2.bf16.msra.mxu0 0
    %764 = vmatprep.subr.bf16.mxu0 0
    %765 = vmatpush2.bf16.msra.mxu0 0
    %766 = vmatprep.subr.bf16.mxu0 0
    %767 = vmatpush2.bf16.msra.mxu0 0
    %768 = vmatprep.mubr.bf16.mxu0 0
    %769 = vmatmul.mubr.bf16.gmra.mxu0 %v692
    %v770 = vpop.f32.mrf.mxu0
    %v771 = vadd.f32 0.0, %v770
    %v772 = vpop.f32.mrf.mxu0
    %v773 = vpop.f32.mrf.mxu0
    %v774 = vpop.f32.mrf.mxu0
    %775 = vdwg.mxu0
    %v777 = vrot.slane %v730, 6
    %v779 = vadd.f32 %v230, %v777
    %v780 = vxor.u32 %v779, 2147483648
    %v781 = vmul.f32 %v780, 1.442695
    %v782 = vpow.pop %v781
    %v783 = vadd.f32 %v782, 1.0
    %v784 = vrcp.pop %v783
    %v785 = vmul.f32 1.0, %v784
    %v787 = vrot.slane %v732, 6
    %v789 = vadd.f32 %v232, %v787
    %v790 = vxor.u32 %v789, 2147483648
    %v791 = vmul.f32 %v790, 1.442695
    %v792 = vpow.pop %v791
    %v793 = vadd.f32 %v792, 1.0
    %v794 = vrcp.pop %v793
    %v795 = vmul.f32 1.0, %v794
    %v796 = vadd.f32 %v771, %v127
    %v798 = vrot.slane %v796, 6
    %v800 = vmul.f32 %v785, %v798
    %v801 = vadd.f32 %v271, %v800
    %v802 = vtanh.pop %v801
    %v803 = vsub.f32 1.0, %v795
    %v804 = vmul.f32 %v803, %v802
    %v806 = vrot.slane %v689, 7
    %v808 = vmul.f32 %v795, %v806
    %v809 = vadd.f32 %v804, %v808
    %v810 = vpack.c.bf16 %v809, %v809
    %v812 = vrot.slane %v810, 1
    %814 = vmatprep.subr.bf16.mxu0 %v549
    %815 = vmatpush1.bf16.msra.mxu0 %v548
    %816 = vmatprep.subr.bf16.mxu0 %v546
    %817 = vmatpush1.bf16.msra.mxu0 %v545
    %818 = vmatprep.subr.bf16.mxu0 %v543
    %819 = vmatpush1.bf16.msra.mxu0 %v542
    %820 = vmatprep.subr.bf16.mxu0 %v540
    %821 = vmatpush1.bf16.msra.mxu0 %v539
    %822 = vmatprep.subr.bf16.mxu0 %v537
    %823 = vmatpush1.bf16.msra.mxu0 %v536
    %824 = vmatprep.subr.bf16.mxu0 %v534
    %825 = vmatpush1.bf16.msra.mxu0 %v533
    %826 = vmatprep.subr.bf16.mxu0 %v531
    %827 = vmatpush1.bf16.msra.mxu0 %v530
    %828 = vmatprep.subr.bf16.mxu0 %v528
    %829 = vmatpush1.bf16.msra.mxu0 %v527
    %830 = vmatprep.subr.bf16.mxu0 0
    %831 = vmatpush2.bf16.msra.mxu0 0
    %832 = vmatprep.subr.bf16.mxu0 0
    %833 = vmatpush2.bf16.msra.mxu0 0
    %834 = vmatprep.subr.bf16.mxu0 0
    %835 = vmatpush2.bf16.msra.mxu0 0
    %836 = vmatprep.subr.bf16.mxu0 0
    %837 = vmatpush2.bf16.msra.mxu0 0
    %838 = vmatprep.subr.bf16.mxu0 0
    %839 = vmatpush2.bf16.msra.mxu0 0
    %840 = vmatprep.subr.bf16.mxu0 0
    %841 = vmatpush2.bf16.msra.mxu0 0
    %842 = vmatprep.subr.bf16.mxu0 0
    %843 = vmatpush2.bf16.msra.mxu0 0
    %844 = vmatprep.subr.bf16.mxu0 0
    %845 = vmatpush2.bf16.msra.mxu0 0
    %846 = vmatprep.mubr.bf16.mxu0 0
    %847 = vmatmul.mubr.bf16.gmra.mxu0 %v812
    %v848 = vpop.f32.mrf.mxu0
    %v849 = vadd.f32 0.0, %v848
    %v850 = vpop.f32.mrf.mxu0
    %v851 = vadd.f32 0.0, %v850
    %v852 = vpop.f32.mrf.mxu0
    %v853 = vpop.f32.mrf.mxu0
    %854 = vdwg.mxu0
    %855 = vmatprep.subr.bf16.mxu0 0
    %856 = vmatpush1.bf16.msra.mxu0 %v550
    %857 = vmatprep.subr.bf16.mxu0 0
    %858 = vmatpush1.bf16.msra.mxu0 %v547
    %859 = vmatprep.subr.bf16.mxu0 0
    %860 = vmatpush1.bf16.msra.mxu0 %v544
    %861 = vmatprep.subr.bf16.mxu0 0
    %862 = vmatpush1.bf16.msra.mxu0 %v541
    %863 = vmatprep.subr.bf16.mxu0 0
    %864 = vmatpush1.bf16.msra.mxu0 %v538
    %865 = vmatprep.subr.bf16.mxu0 0
    %866 = vmatpush1.bf16.msra.mxu0 %v535
    %867 = vmatprep.subr.bf16.mxu0 0
    %868 = vmatpush1.bf16.msra.mxu0 %v532
    %869 = vmatprep.subr.bf16.mxu0 0
    %870 = vmatpush1.bf16.msra.mxu0 %v529
    %871 = vmatprep.subr.bf16.mxu0 0
    %872 = vmatpush2.bf16.msra.mxu0 0
    %873 = vmatprep.subr.bf16.mxu0 0
    %874 = vmatpush2.bf16.msra.mxu0 0
    %875 = vmatprep.subr.bf16.mxu0 0
    %876 = vmatpush2.bf16.msra.mxu0 0
    %877 = vmatprep.subr.bf16.mxu0 0
    %878 = vmatpush2.bf16.msra.mxu0 0
    %879 = vmatprep.subr.bf16.mxu0 0
    %880 = vmatpush2.bf16.msra.mxu0 0
    %881 = vmatprep.subr.bf16.mxu0 0
    %882 = vmatpush2.bf16.msra.mxu0 0
    %883 = vmatprep.subr.bf16.mxu0 0
    %884 = vmatpush2.bf16.msra.mxu0 0
    %885 = vmatprep.subr.bf16.mxu0 0
    %886 = vmatpush2.bf16.msra.mxu0 0
    %887 = vmatprep.mubr.bf16.mxu0 0
    %888 = vmatmul.mubr.bf16.gmra.mxu0 %v812
    %v889 = vpop.f32.mrf.mxu0
    %v890 = vadd.f32 0.0, %v889
    %v891 = vpop.f32.mrf.mxu0
    %v892 = vpop.f32.mrf.mxu0
    %v893 = vpop.f32.mrf.mxu0
    %894 = vdwg.mxu0
    %v896 = vrot.slane %v849, 5
    %v898 = vadd.f32 %v230, %v896
    %v899 = vxor.u32 %v898, 2147483648
    %v900 = vmul.f32 %v899, 1.442695
    %v901 = vpow.pop %v900
    %v902 = vadd.f32 %v901, 1.0
    %v903 = vrcp.pop %v902
    %v904 = vmul.f32 1.0, %v903
    %v906 = vrot.slane %v851, 5
    %v908 = vadd.f32 %v232, %v906
    %v909 = vxor.u32 %v908, 2147483648
    %v910 = vmul.f32 %v909, 1.442695
    %v911 = vpow.pop %v910
    %v912 = vadd.f32 %v911, 1.0
    %v913 = vrcp.pop %v912
    %v914 = vmul.f32 1.0, %v913
    %v915 = vadd.f32 %v890, %v127
    %v917 = vrot.slane %v915, 5
    %v919 = vmul.f32 %v904, %v917
    %v920 = vadd.f32 %v271, %v919
    %v921 = vtanh.pop %v920
    %v922 = vsub.f32 1.0, %v914
    %v923 = vmul.f32 %v922, %v921
    %v925 = vrot.slane %v809, 7
    %v927 = vmul.f32 %v914, %v925
    %v928 = vadd.f32 %v923, %v927
    %v929 = vpack.c.bf16 %v928, %v928
    %v931 = vshrl.u32 %v929, 16
    %v933 = vrot.slane %v931, 1
    %935 = vmatprep.subr.bf16.mxu0 %v549
    %936 = vmatpush1.bf16.msra.mxu0 %v548
    %937 = vmatprep.subr.bf16.mxu0 %v546
    %938 = vmatpush1.bf16.msra.mxu0 %v545
    %939 = vmatprep.subr.bf16.mxu0 %v543
    %940 = vmatpush1.bf16.msra.mxu0 %v542
    %941 = vmatprep.subr.bf16.mxu0 %v540
    %942 = vmatpush1.bf16.msra.mxu0 %v539
    %943 = vmatprep.subr.bf16.mxu0 %v537
    %944 = vmatpush1.bf16.msra.mxu0 %v536
    %945 = vmatprep.subr.bf16.mxu0 %v534
    %946 = vmatpush1.bf16.msra.mxu0 %v533
    %947 = vmatprep.subr.bf16.mxu0 %v531
    %948 = vmatpush1.bf16.msra.mxu0 %v530
    %949 = vmatprep.subr.bf16.mxu0 %v528
    %950 = vmatpush1.bf16.msra.mxu0 %v527
    %951 = vmatprep.subr.bf16.mxu0 0
    %952 = vmatpush2.bf16.msra.mxu0 0
    %953 = vmatprep.subr.bf16.mxu0 0
    %954 = vmatpush2.bf16.msra.mxu0 0
    %955 = vmatprep.subr.bf16.mxu0 0
    %956 = vmatpush2.bf16.msra.mxu0 0
    %957 = vmatprep.subr.bf16.mxu0 0
    %958 = vmatpush2.bf16.msra.mxu0 0
    %959 = vmatprep.subr.bf16.mxu0 0
    %960 = vmatpush2.bf16.msra.mxu0 0
    %961 = vmatprep.subr.bf16.mxu0 0
    %962 = vmatpush2.bf16.msra.mxu0 0
    %963 = vmatprep.subr.bf16.mxu0 0
    %964 = vmatpush2.bf16.msra.mxu0 0
    %965 = vmatprep.subr.bf16.mxu0 0
    %966 = vmatpush2.bf16.msra.mxu0 0
    %967 = vmatprep.mubr.bf16.mxu0 0
    %968 = vmatmul.mubr.bf16.gmra.mxu0 %v933
    %v969 = vpop.f32.mrf.mxu0
    %v970 = vadd.f32 0.0, %v969
    %v971 = vpop.f32.mrf.mxu0
    %v972 = vadd.f32 0.0, %v971
    %v973 = vpop.f32.mrf.mxu0
    %v974 = vpop.f32.mrf.mxu0
    %975 = vdwg.mxu0
    %976 = vmatprep.subr.bf16.mxu0 0
    %977 = vmatpush1.bf16.msra.mxu0 %v550
    %978 = vmatprep.subr.bf16.mxu0 0
    %979 = vmatpush1.bf16.msra.mxu0 %v547
    %980 = vmatprep.subr.bf16.mxu0 0
    %981 = vmatpush1.bf16.msra.mxu0 %v544
    %982 = vmatprep.subr.bf16.mxu0 0
    %983 = vmatpush1.bf16.msra.mxu0 %v541
    %984 = vmatprep.subr.bf16.mxu0 0
    %985 = vmatpush1.bf16.msra.mxu0 %v538
    %986 = vmatprep.subr.bf16.mxu0 0
    %987 = vmatpush1.bf16.msra.mxu0 %v535
    %988 = vmatprep.subr.bf16.mxu0 0
    %989 = vmatpush1.bf16.msra.mxu0 %v532
    %990 = vmatprep.subr.bf16.mxu0 0
    %991 = vmatpush1.bf16.msra.mxu0 %v529
    %992 = vmatprep.subr.bf16.mxu0 0
    %993 = vmatpush2.bf16.msra.mxu0 0
    %994 = vmatprep.subr.bf16.mxu0 0
    %995 = vmatpush2.bf16.msra.mxu0 0
    %996 = vmatprep.subr.bf16.mxu0 0
    %997 = vmatpush2.bf16.msra.mxu0 0
    %998 = vmatprep.subr.bf16.mxu0 0
    %999 = vmatpush2.bf16.msra.mxu0 0
    %1000 = vmatprep.subr.bf16.mxu0 0
    %1001 = vmatpush2.bf16.msra.mxu0 0
    %1002 = vmatprep.subr.bf16.mxu0 0
    %1003 = vmatpush2.bf16.msra.mxu0 0
    %1004 = vmatprep.subr.bf16.mxu0 0
    %1005 = vmatpush2.bf16.msra.mxu0 0
    %1006 = vmatprep.subr.bf16.mxu0 0
    %1007 = vmatpush2.bf16.msra.mxu0 0
    %1008 = vmatprep.mubr.bf16.mxu0 0
    %1009 = vmatmul.mubr.bf16.gmra.mxu0 %v933
    %v1010 = vpop.f32.mrf.mxu0
    %v1011 = vadd.f32 0.0, %v1010
    %v1012 = vpop.f32.mrf.mxu0
    %v1013 = vpop.f32.mrf.mxu0
    %v1014 = vpop.f32.mrf.mxu0
    %1015 = vdwg.mxu0
    %v1017 = vrot.slane %v970, 4
    %v1019 = vadd.f32 %v230, %v1017
    %v1020 = vxor.u32 %v1019, 2147483648
    %v1021 = vmul.f32 %v1020, 1.442695
    %v1022 = vpow.pop %v1021
    %v1023 = vadd.f32 %v1022, 1.0
    %v1024 = vrcp.pop %v1023
    %v1025 = vmul.f32 1.0, %v1024
    %v1027 = vrot.slane %v972, 4
    %v1029 = vadd.f32 %v232, %v1027
    %v1030 = vxor.u32 %v1029, 2147483648
    %v1031 = vmul.f32 %v1030, 1.442695
    %v1032 = vpow.pop %v1031
    %v1033 = vadd.f32 %v1032, 1.0
    %v1034 = vrcp.pop %v1033
    %v1035 = vmul.f32 1.0, %v1034
    %v1036 = vadd.f32 %v1011, %v127
    %v1038 = vrot.slane %v1036, 4
    %v1040 = vmul.f32 %v1025, %v1038
    %v1041 = vadd.f32 %v271, %v1040
    %v1042 = vtanh.pop %v1041
    %v1043 = vsub.f32 1.0, %v1035
    %v1044 = vmul.f32 %v1043, %v1042
    %v1046 = vrot.slane %v928, 7
    %v1048 = vmul.f32 %v1035, %v1046
    %v1049 = vadd.f32 %v1044, %v1048
    %v1050 = vpack.c.bf16 %v1049, %v1049
    %v1052 = vrot.slane %v1050, 2
    %1054 = vmatprep.subr.bf16.mxu0 %v549
    %1055 = vmatpush1.bf16.msra.mxu0 %v548
    %1056 = vmatprep.subr.bf16.mxu0 %v546
    %1057 = vmatpush1.bf16.msra.mxu0 %v545
    %1058 = vmatprep.subr.bf16.mxu0 %v543
    %1059 = vmatpush1.bf16.msra.mxu0 %v542
    %1060 = vmatprep.subr.bf16.mxu0 %v540
    %1061 = vmatpush1.bf16.msra.mxu0 %v539
    %1062 = vmatprep.subr.bf16.mxu0 %v537
    %1063 = vmatpush1.bf16.msra.mxu0 %v536
    %1064 = vmatprep.subr.bf16.mxu0 %v534
    %1065 = vmatpush1.bf16.msra.mxu0 %v533
    %1066 = vmatprep.subr.bf16.mxu0 %v531
    %1067 = vmatpush1.bf16.msra.mxu0 %v530
    %1068 = vmatprep.subr.bf16.mxu0 %v528
    %1069 = vmatpush1.bf16.msra.mxu0 %v527
    %1070 = vmatprep.subr.bf16.mxu0 0
    %1071 = vmatpush2.bf16.msra.mxu0 0
    %1072 = vmatprep.subr.bf16.mxu0 0
    %1073 = vmatpush2.bf16.msra.mxu0 0
    %1074 = vmatprep.subr.bf16.mxu0 0
    %1075 = vmatpush2.bf16.msra.mxu0 0
    %1076 = vmatprep.subr.bf16.mxu0 0
    %1077 = vmatpush2.bf16.msra.mxu0 0
    %1078 = vmatprep.subr.bf16.mxu0 0
    %1079 = vmatpush2.bf16.msra.mxu0 0
    %1080 = vmatprep.subr.bf16.mxu0 0
    %1081 = vmatpush2.bf16.msra.mxu0 0
    %1082 = vmatprep.subr.bf16.mxu0 0
    %1083 = vmatpush2.bf16.msra.mxu0 0
    %1084 = vmatprep.subr.bf16.mxu0 0
    %1085 = vmatpush2.bf16.msra.mxu0 0
    %1086 = vmatprep.mubr.bf16.mxu0 0
    %1087 = vmatmul.mubr.bf16.gmra.mxu0 %v1052
    %v1088 = vpop.f32.mrf.mxu0
    %v1089 = vadd.f32 0.0, %v1088
    %v1090 = vpop.f32.mrf.mxu0
    %v1091 = vadd.f32 0.0, %v1090
    %v1092 = vpop.f32.mrf.mxu0
    %v1093 = vpop.f32.mrf.mxu0
    %1094 = vdwg.mxu0
    %1095 = vmatprep.subr.bf16.mxu0 0
    %1096 = vmatpush1.bf16.msra.mxu0 %v550
    %1097 = vmatprep.subr.bf16.mxu0 0
    %1098 = vmatpush1.bf16.msra.mxu0 %v547
    %1099 = vmatprep.subr.bf16.mxu0 0
    %1100 = vmatpush1.bf16.msra.mxu0 %v544
    %1101 = vmatprep.subr.bf16.mxu0 0
    %1102 = vmatpush1.bf16.msra.mxu0 %v541
    %1103 = vmatprep.subr.bf16.mxu0 0
    %1104 = vmatpush1.bf16.msra.mxu0 %v538
    %1105 = vmatprep.subr.bf16.mxu0 0
    %1106 = vmatpush1.bf16.msra.mxu0 %v535
    %1107 = vmatprep.subr.bf16.mxu0 0
    %1108 = vmatpush1.bf16.msra.mxu0 %v532
    %1109 = vmatprep.subr.bf16.mxu0 0
    %1110 = vmatpush1.bf16.msra.mxu0 %v529
    %1111 = vmatprep.subr.bf16.mxu0 0
    %1112 = vmatpush2.bf16.msra.mxu0 0
    %1113 = vmatprep.subr.bf16.mxu0 0
    %1114 = vmatpush2.bf16.msra.mxu0 0
    %1115 = vmatprep.subr.bf16.mxu0 0
    %1116 = vmatpush2.bf16.msra.mxu0 0
    %1117 = vmatprep.subr.bf16.mxu0 0
    %1118 = vmatpush2.bf16.msra.mxu0 0
    %1119 = vmatprep.subr.bf16.mxu0 0
    %1120 = vmatpush2.bf16.msra.mxu0 0
    %1121 = vmatprep.subr.bf16.mxu0 0
    %1122 = vmatpush2.bf16.msra.mxu0 0
    %1123 = vmatprep.subr.bf16.mxu0 0
    %1124 = vmatpush2.bf16.msra.mxu0 0
    %1125 = vmatprep.subr.bf16.mxu0 0
    %1126 = vmatpush2.bf16.msra.mxu0 0
    %1127 = vmatprep.mubr.bf16.mxu0 0
    %1128 = vmatmul.mubr.bf16.gmra.mxu0 %v1052
    %v1129 = vpop.f32.mrf.mxu0
    %v1130 = vadd.f32 0.0, %v1129
    %v1131 = vpop.f32.mrf.mxu0
    %v1132 = vpop.f32.mrf.mxu0
    %v1133 = vpop.f32.mrf.mxu0
    %1134 = vdwg.mxu0
    %v1136 = vrot.slane %v1089, 3
    %v1138 = vadd.f32 %v230, %v1136
    %v1139 = vxor.u32 %v1138, 2147483648
    %v1140 = vmul.f32 %v1139, 1.442695
    %v1141 = vpow.pop %v1140
    %v1142 = vadd.f32 %v1141, 1.0
    %v1143 = vrcp.pop %v1142
    %v1144 = vmul.f32 1.0, %v1143
    %v1146 = vrot.slane %v1091, 3
    %v1148 = vadd.f32 %v232, %v1146
    %v1149 = vxor.u32 %v1148, 2147483648
    %v1150 = vmul.f32 %v1149, 1.442695
    %v1151 = vpow.pop %v1150
    %v1152 = vadd.f32 %v1151, 1.0
    %v1153 = vrcp.pop %v1152
    %v1154 = vmul.f32 1.0, %v1153
    %v1155 = vadd.f32 %v1130, %v127
    %v1157 = vrot.slane %v1155, 3
    %v1159 = vmul.f32 %v1144, %v1157
    %v1160 = vadd.f32 %v271, %v1159
    %v1161 = vtanh.pop %v1160
    %v1162 = vsub.f32 1.0, %v1154
    %v1163 = vmul.f32 %v1162, %v1161
    %v1165 = vrot.slane %v1049, 7
    %v1167 = vmul.f32 %v1154, %v1165
    %v1168 = vadd.f32 %v1163, %v1167
    %v1169 = vpack.c.bf16 %v1168, %v1168
    %v1171 = vshrl.u32 %v1169, 16
    %v1173 = vrot.slane %v1171, 2
    %1175 = vmatprep.subr.bf16.mxu0 %v549
    %1176 = vmatpush1.bf16.msra.mxu0 %v548
    %1177 = vmatprep.subr.bf16.mxu0 %v546
    %1178 = vmatpush1.bf16.msra.mxu0 %v545
    %1179 = vmatprep.subr.bf16.mxu0 %v543
    %1180 = vmatpush1.bf16.msra.mxu0 %v542
    %1181 = vmatprep.subr.bf16.mxu0 %v540
    %1182 = vmatpush1.bf16.msra.mxu0 %v539
    %1183 = vmatprep.subr.bf16.mxu0 %v537
    %1184 = vmatpush1.bf16.msra.mxu0 %v536
    %1185 = vmatprep.subr.bf16.mxu0 %v534
    %1186 = vmatpush1.bf16.msra.mxu0 %v533
    %1187 = vmatprep.subr.bf16.mxu0 %v531
    %1188 = vmatpush1.bf16.msra.mxu0 %v530
    %1189 = vmatprep.subr.bf16.mxu0 %v528
    %1190 = vmatpush1.bf16.msra.mxu0 %v527
    %1191 = vmatprep.subr.bf16.mxu0 0
    %1192 = vmatpush2.bf16.msra.mxu0 0
    %1193 = vmatprep.subr.bf16.mxu0 0
    %1194 = vmatpush2.bf16.msra.mxu0 0
    %1195 = vmatprep.subr.bf16.mxu0 0
    %1196 = vmatpush2.bf16.msra.mxu0 0
    %1197 = vmatprep.subr.bf16.mxu0 0
    %1198 = vmatpush2.bf16.msra.mxu0 0
    %1199 = vmatprep.subr.bf16.mxu0 0
    %1200 = vmatpush2.bf16.msra.mxu0 0
    %1201 = vmatprep.subr.bf16.mxu0 0
    %1202 = vmatpush2.bf16.msra.mxu0 0
    %1203 = vmatprep.subr.bf16.mxu0 0
    %1204 = vmatpush2.bf16.msra.mxu0 0
    %1205 = vmatprep.subr.bf16.mxu0 0
    %1206 = vmatpush2.bf16.msra.mxu0 0
    %1207 = vmatprep.mubr.bf16.mxu0 0
    %1208 = vmatmul.mubr.bf16.gmra.mxu0 %v1173
    %v1209 = vpop.f32.mrf.mxu0
    %v1210 = vadd.f32 0.0, %v1209
    %v1211 = vpop.f32.mrf.mxu0
    %v1212 = vadd.f32 0.0, %v1211
    %v1213 = vpop.f32.mrf.mxu0
    %v1214 = vpop.f32.mrf.mxu0
    %1215 = vdwg.mxu0
    %1216 = vmatprep.subr.bf16.mxu0 0
    %1217 = vmatpush1.bf16.msra.mxu0 %v550
    %1218 = vmatprep.subr.bf16.mxu0 0
    %1219 = vmatpush1.bf16.msra.mxu0 %v547
    %1220 = vmatprep.subr.bf16.mxu0 0
    %1221 = vmatpush1.bf16.msra.mxu0 %v544
    %1222 = vmatprep.subr.bf16.mxu0 0
    %1223 = vmatpush1.bf16.msra.mxu0 %v541
    %1224 = vmatprep.subr.bf16.mxu0 0
    %1225 = vmatpush1.bf16.msra.mxu0 %v538
    %1226 = vmatprep.subr.bf16.mxu0 0
    %1227 = vmatpush1.bf16.msra.mxu0 %v535
    %1228 = vmatprep.subr.bf16.mxu0 0
    %1229 = vmatpush1.bf16.msra.mxu0 %v532
    %1230 = vmatprep.subr.bf16.mxu0 0
    %1231 = vmatpush1.bf16.msra.mxu0 %v529
    %1232 = vmatprep.subr.bf16.mxu0 0
    %1233 = vmatpush2.bf16.msra.mxu0 0
    %1234 = vmatprep.subr.bf16.mxu0 0
    %1235 = vmatpush2.bf16.msra.mxu0 0
    %1236 = vmatprep.subr.bf16.mxu0 0
    %1237 = vmatpush2.bf16.msra.mxu0 0
    %1238 = vmatprep.subr.bf16.mxu0 0
    %1239 = vmatpush2.bf16.msra.mxu0 0
    %1240 = vmatprep.subr.bf16.mxu0 0
    %1241 = vmatpush2.bf16.msra.mxu0 0
    %1242 = vmatprep.subr.bf16.mxu0 0
    %1243 = vmatpush2.bf16.msra.mxu0 0
    %1244 = vmatprep.subr.bf16.mxu0 0
    %1245 = vmatpush2.bf16.msra.mxu0 0
    %1246 = vmatprep.subr.bf16.mxu0 0
    %1247 = vmatpush2.bf16.msra.mxu0 0
    %1248 = vmatprep.mubr.bf16.mxu0 0
    %1249 = vmatmul.mubr.bf16.gmra.mxu0 %v1173
    %v1250 = vpop.f32.mrf.mxu0
    %v1251 = vadd.f32 0.0, %v1250
    %v1252 = vpop.f32.mrf.mxu0
    %v1253 = vpop.f32.mrf.mxu0
    %v1254 = vpop.f32.mrf.mxu0
    %1255 = vdwg.mxu0
    %v1257 = vrot.slane %v1210, 2
    %v1259 = vadd.f32 %v230, %v1257
    %v1260 = vxor.u32 %v1259, 2147483648
    %v1261 = vmul.f32 %v1260, 1.442695
    %v1262 = vpow.pop %v1261
    %v1263 = vadd.f32 %v1262, 1.0
    %v1264 = vrcp.pop %v1263
    %v1265 = vmul.f32 1.0, %v1264
    %v1267 = vrot.slane %v1212, 2
    %v1269 = vadd.f32 %v232, %v1267
    %v1270 = vxor.u32 %v1269, 2147483648
    %v1271 = vmul.f32 %v1270, 1.442695
    %v1272 = vpow.pop %v1271
    %v1273 = vadd.f32 %v1272, 1.0
    %v1274 = vrcp.pop %v1273
    %v1275 = vmul.f32 1.0, %v1274
    %v1276 = vadd.f32 %v1251, %v127
    %v1278 = vrot.slane %v1276, 2
    %v1280 = vmul.f32 %v1265, %v1278
    %v1281 = vadd.f32 %v271, %v1280
    %v1282 = vtanh.pop %v1281
    %v1283 = vsub.f32 1.0, %v1275
    %v1284 = vmul.f32 %v1283, %v1282
    %v1286 = vrot.slane %v1168, 7
    %v1288 = vmul.f32 %v1275, %v1286
    %v1289 = vadd.f32 %v1284, %v1288
    %v1290 = vpack.c.bf16 %v1289, %v1289
    %v1292 = vrot.slane %v1290, 3
    %1294 = vmatprep.subr.bf16.mxu0 %v549
    %1295 = vmatpush1.bf16.msra.mxu0 %v548
    %1296 = vmatprep.subr.bf16.mxu0 %v546
    %1297 = vmatpush1.bf16.msra.mxu0 %v545
    %1298 = vmatprep.subr.bf16.mxu0 %v543
    %1299 = vmatpush1.bf16.msra.mxu0 %v542
    %1300 = vmatprep.subr.bf16.mxu0 %v540
    %1301 = vmatpush1.bf16.msra.mxu0 %v539
    %1302 = vmatprep.subr.bf16.mxu0 %v537
    %1303 = vmatpush1.bf16.msra.mxu0 %v536
    %1304 = vmatprep.subr.bf16.mxu0 %v534
    %1305 = vmatpush1.bf16.msra.mxu0 %v533
    %1306 = vmatprep.subr.bf16.mxu0 %v531
    %1307 = vmatpush1.bf16.msra.mxu0 %v530
    %1308 = vmatprep.subr.bf16.mxu0 %v528
    %1309 = vmatpush1.bf16.msra.mxu0 %v527
    %1310 = vmatprep.subr.bf16.mxu0 0
    %1311 = vmatpush2.bf16.msra.mxu0 0
    %1312 = vmatprep.subr.bf16.mxu0 0
    %1313 = vmatpush2.bf16.msra.mxu0 0
    %1314 = vmatprep.subr.bf16.mxu0 0
    %1315 = vmatpush2.bf16.msra.mxu0 0
    %1316 = vmatprep.subr.bf16.mxu0 0
    %1317 = vmatpush2.bf16.msra.mxu0 0
    %1318 = vmatprep.subr.bf16.mxu0 0
    %1319 = vmatpush2.bf16.msra.mxu0 0
    %1320 = vmatprep.subr.bf16.mxu0 0
    %1321 = vmatpush2.bf16.msra.mxu0 0
    %1322 = vmatprep.subr.bf16.mxu0 0
    %1323 = vmatpush2.bf16.msra.mxu0 0
    %1324 = vmatprep.subr.bf16.mxu0 0
    %1325 = vmatpush2.bf16.msra.mxu0 0
    %1326 = vmatprep.mubr.bf16.mxu0 0
    %1327 = vmatmul.mubr.bf16.gmra.mxu0 %v1292
    %v1328 = vpop.f32.mrf.mxu0
    %v1329 = vadd.f32 0.0, %v1328
    %v1330 = vpop.f32.mrf.mxu0
    %v1331 = vadd.f32 0.0, %v1330
    %v1332 = vpop.f32.mrf.mxu0
    %v1333 = vpop.f32.mrf.mxu0
    %1334 = vdwg.mxu0
    %1335 = vmatprep.subr.bf16.mxu0 0
    %1336 = vmatpush1.bf16.msra.mxu0 %v550
    %1337 = vmatprep.subr.bf16.mxu0 0
    %1338 = vmatpush1.bf16.msra.mxu0 %v547
    %1339 = vmatprep.subr.bf16.mxu0 0
    %1340 = vmatpush1.bf16.msra.mxu0 %v544
    %1341 = vmatprep.subr.bf16.mxu0 0
    %1342 = vmatpush1.bf16.msra.mxu0 %v541
    %1343 = vmatprep.subr.bf16.mxu0 0
    %1344 = vmatpush1.bf16.msra.mxu0 %v538
    %1345 = vmatprep.subr.bf16.mxu0 0
    %1346 = vmatpush1.bf16.msra.mxu0 %v535
    %1347 = vmatprep.subr.bf16.mxu0 0
    %1348 = vmatpush1.bf16.msra.mxu0 %v532
    %1349 = vmatprep.subr.bf16.mxu0 0
    %1350 = vmatpush1.bf16.msra.mxu0 %v529
    %1351 = vmatprep.subr.bf16.mxu0 0
    %1352 = vmatpush2.bf16.msra.mxu0 0
    %1353 = vmatprep.subr.bf16.mxu0 0
    %1354 = vmatpush2.bf16.msra.mxu0 0
    %1355 = vmatprep.subr.bf16.mxu0 0
    %1356 = vmatpush2.bf16.msra.mxu0 0
    %1357 = vmatprep.subr.bf16.mxu0 0
    %1358 = vmatpush2.bf16.msra.mxu0 0
    %1359 = vmatprep.subr.bf16.mxu0 0
    %1360 = vmatpush2.bf16.msra.mxu0 0
    %1361 = vmatprep.subr.bf16.mxu0 0
    %1362 = vmatpush2.bf16.msra.mxu0 0
    %1363 = vmatprep.subr.bf16.mxu0 0
    %1364 = vmatpush2.bf16.msra.mxu0 0
    %1365 = vmatprep.subr.bf16.mxu0 0
    %1366 = vmatpush2.bf16.msra.mxu0 0
    %1367 = vmatprep.mubr.bf16.mxu0 0
    %1368 = vmatmul.mubr.bf16.gmra.mxu0 %v1292
    %v1369 = vpop.f32.mrf.mxu0
    %v1370 = vadd.f32 0.0, %v1369
    %v1371 = vpop.f32.mrf.mxu0
    %v1372 = vpop.f32.mrf.mxu0
    %v1373 = vpop.f32.mrf.mxu0
    %1374 = vdwg.mxu0
    %v1376 = vrot.slane %v1329, 1
    %v1378 = vadd.f32 %v230, %v1376
    %v1379 = vxor.u32 %v1378, 2147483648
    %v1380 = vmul.f32 %v1379, 1.442695
    %v1381 = vpow.pop %v1380
    %v1382 = vadd.f32 %v1381, 1.0
    %v1383 = vrcp.pop %v1382
    %v1384 = vmul.f32 1.0, %v1383
    %v1386 = vrot.slane %v1331, 1
    %v1388 = vadd.f32 %v232, %v1386
    %v1389 = vxor.u32 %v1388, 2147483648
    %v1390 = vmul.f32 %v1389, 1.442695
    %v1391 = vpow.pop %v1390
    %v1392 = vadd.f32 %v1391, 1.0
    %v1393 = vrcp.pop %v1392
    %v1394 = vmul.f32 1.0, %v1393
    %v1395 = vadd.f32 %v1370, %v127
    %v1397 = vrot.slane %v1395, 1
    %v1399 = vmul.f32 %v1384, %v1397
    %v1400 = vadd.f32 %v271, %v1399
    %v1401 = vtanh.pop %v1400
    %v1402 = vsub.f32 1.0, %v1394
    %v1403 = vmul.f32 %v1402, %v1401
    %v1405 = vrot.slane %v1289, 7
    %v1407 = vmul.f32 %v1394, %v1405
    %v1408 = vadd.f32 %v1403, %v1407
    %v1409 = vpack.c.bf16 %v1408, %v1408
    %v1411 = vshrl.u32 %v1409, 16
    %v1413 = vrot.slane %v1411, 3
    %v1431 = vunpack.c.l.b16 %v92
    %v1432 = vunpack.c.l.b16 %v93
    %v1433 = vunpack.c.l.b16 %v94
    %v1434 = vunpack.c.l.b16 %v95
    %v1435 = vunpack.c.l.b16 %v96
    %v1436 = vunpack.c.l.b16 %v97
    %v1437 = vunpack.c.l.b16 %v98
    %v1438 = vunpack.c.l.b16 %v99
    %v1439 = vunpack.c.l.b16 %v100
    %v1440 = vunpack.c.l.b16 %v101
    %v1441 = vunpack.c.l.b16 %v102
    %v1442 = vunpack.c.l.b16 %v103
    %v1443 = vunpack.c.l.b16 %v104
    %v1444 = vunpack.c.l.b16 %v105
    %v1445 = vunpack.c.l.b16 %v106
    %v1446 = vunpack.c.l.b16 %v107
    %v1447 = vpack.c.b16 %v1432, %v1431
    %v1448 = vpack.c.b16 %v1434, %v1433
    %v1449 = vpack.c.b16 %v1436, %v1435
    %v1450 = vpack.c.b16 %v1438, %v1437
    %v1451 = vpack.c.b16 %v1440, %v1439
    %v1452 = vpack.c.b16 %v1442, %v1441
    %v1453 = vpack.c.b16 %v1444, %v1443
    %v1454 = vpack.c.b16 %v1446, %v1445
    %1463 = vmatprep.subr.bf16.mxu0 0
    %1464 = vmatpush1.bf16.msra.mxu0 %v1454
    %1465 = vmatprep.subr.bf16.mxu0 0
    %1466 = vmatpush1.bf16.msra.mxu0 %v1453
    %1467 = vmatprep.subr.bf16.mxu0 0
    %1468 = vmatpush1.bf16.msra.mxu0 %v1452
    %1469 = vmatprep.subr.bf16.mxu0 0
    %1470 = vmatpush1.bf16.msra.mxu0 %v1451
    %1471 = vmatprep.subr.bf16.mxu0 0
    %1472 = vmatpush1.bf16.msra.mxu0 %v1450
    %1473 = vmatprep.subr.bf16.mxu0 0
    %1474 = vmatpush1.bf16.msra.mxu0 %v1449
    %1475 = vmatprep.subr.bf16.mxu0 0
    %1476 = vmatpush1.bf16.msra.mxu0 %v1448
    %1477 = vmatprep.subr.bf16.mxu0 0
    %1478 = vmatpush1.bf16.msra.mxu0 %v1447
    %1479 = vmatprep.subr.bf16.mxu0 0
    %1480 = vmatpush2.bf16.msra.mxu0 0
    %1481 = vmatprep.subr.bf16.mxu0 0
    %1482 = vmatpush2.bf16.msra.mxu0 0
    %1483 = vmatprep.subr.bf16.mxu0 0
    %1484 = vmatpush2.bf16.msra.mxu0 0
    %1485 = vmatprep.subr.bf16.mxu0 0
    %1486 = vmatpush2.bf16.msra.mxu0 0
    %1487 = vmatprep.subr.bf16.mxu0 0
    %1488 = vmatpush2.bf16.msra.mxu0 0
    %1489 = vmatprep.subr.bf16.mxu0 0
    %1490 = vmatpush2.bf16.msra.mxu0 0
    %1491 = vmatprep.subr.bf16.mxu0 0
    %1492 = vmatpush2.bf16.msra.mxu0 0
    %1493 = vmatprep.subr.bf16.mxu0 0
    %1494 = vmatpush2.bf16.msra.mxu0 0
    %1495 = vmatprep.mubr.bf16.mxu0 0
    %1496 = vmatmul.mubr.bf16.gmra.mxu0 %v1413
    %v1497 = vpop.f32.mrf.mxu0
    %v1498 = vadd.f32 %v424, %v1497
    %v1499 = vpop.f32.mrf.mxu0
    %v1500 = vpop.f32.mrf.mxu0
    %v1501 = vpop.f32.mrf.mxu0
    %1502 = vdwg.mxu0
    %vm1503 = vcmask 57344
    %1504 = vst.msk [vmem:[#allocation8] sm:$0x1] %vm1503, %v1498
    // Predicated region
    $region26: #{tpu_custom_call.1} parent=1 // pred_check
      _
    $region27: #{tpu_custom_call.1} parent=1 // pred_check_branch
      %1506 = sbr.rel (0) target = $region29
    $region28: #{tpu_custom_call.1} parent=1 // pred_region
      %s1508 = ssub.s32 16, 16
      %1509 = vsyncadd [#allocation4], %s1508
      %s1511 = sshll.u32 [#allocation8], 4
      %s1512 = int_to_ptr.vmem [resolvable:$true] %s1511
      %1514 = dma.vmem_to_hbm [thread:$0]  %s1512, 16, %s3, [#allocation4]
    $region29: #{tpu_custom_call.1} parent=1 // pred_fallthru
      _
    // Predicated region
    $region30: #{tpu_custom_call.1} parent=1 // pred_check
      _
    $region31: #{tpu_custom_call.1} parent=1 // pred_check_branch
      %1516 = sbr.rel (0) target = $region33
    $region32: #{tpu_custom_call.1} parent=1 // pred_region
      %1517 = dma.done [#allocation4], 16
    $region33: #{tpu_custom_call.1} parent=1 // pred_fallthru
      _
    %1518 = vsyncpa [#allocation3], 1
    %1519 = vsyncpa [#allocation6], 1
    %1520 = vsyncpa [#allocation4], 1

</llo_original>
